<compile_context>
chip_gen: v6e
topology: v6e:2x2x1
jax: 0.10.0
libtpu: 0.0.40
codegen_flags: <defaults>
</compile_context>

<pallas_src>
import functools

import jax
import jax.numpy as jnp
from jax.experimental import pallas as pl
from jax.experimental.pallas import tpu as pltpu

LANE = 128


def _round_up(x, m):
    return (x + m - 1) // m * m


# -----------------------------------------------------------------------------
# Fused kernel: one grid step = one whole image (conv3x3+ReLU -> GAP -> MLP head).
# -----------------------------------------------------------------------------
def _fused_kernel(x_ref, w9_ref, bc_ref, w1_ref, b1_ref, w2_ref, b2_ref,
                  o_ref, pbuf, *, inv_hw):
    # x_ref  : (H+2, W+2, Cin) bf16   zero-padded image (auto-pipelined block)
    # w9_ref : (KP, CP)  bf16         im2col conv weight, K padded to 128
    # bc_ref : (1, CP)   f32          conv bias (zero padded to 128 lanes)
    # w1_ref : (CP, MP)  bf16, b1_ref: (1, MP) f32     fc1
    # w2_ref : (MP, OP)  bf16, b2_ref: (1, OP) f32     fc2
    # o_ref  : (1, OP)   f32          per-image output
    # pbuf   : (H, W, KP) bf16        lane-dense im2col patch scratch
    hp2, wp2, cin = x_ref.shape
    h, w = hp2 - 2, wp2 - 2
    kp = pbuf.shape[-1]

    xp = x_ref[...]                                   # (H+2, W+2, Cin) bf16

    # One dense (unmasked) clear of the patch buffer, then drop the nine 3x3 taps
    # into their K columns.  The K-padding columns stay zero, matching the
    # zero-padded weight rows.
    pbuf[...] = jnp.zeros_like(pbuf)
    for kh in range(3):
        for kw in range(3):
            j = kh * 3 + kw
            pbuf[:, :, j * cin:(j + 1) * cin] = xp[kh:kh + h, kw:kw + w, :]

    # (H, W, KP) -> (H*W, KP): minor dim unchanged, W matches the bf16 sublane
    # packing, so this reshape preserves tile order (no relayout copy).
    patches = pbuf[...].reshape(h * w, kp)

    # conv3x3 + bias + ReLU as one MXU matmul: M=H*W, K=128, N=CP (bf16 in, f32 acc).
    feat = jnp.dot(patches, w9_ref[...], preferred_element_type=jnp.float32)
    feat = jnp.maximum(feat + bc_ref[...], 0.0)       # (H*W, CP) f32

    # Global average pool: single f32 cross-sublane reduce (XLU; MXU stays free).
    pooled = jnp.sum(feat, axis=0, keepdims=True) * inv_hw     # (1, CP) f32

    # MLP head: Linear -> ReLU -> Linear (bf16 operands, f32 accumulation).
    hdn = jnp.dot(pooled.astype(jnp.bfloat16), w1_ref[...],
                  preferred_element_type=jnp.float32) + b1_ref[...]
    hdn = jnp.maximum(hdn, 0.0)
    out = jnp.dot(hdn.astype(jnp.bfloat16), w2_ref[...],
                  preferred_element_type=jnp.float32) + b2_ref[...]
    o_ref[...] = out                                   # (1, OP) lane-dense store


# -----------------------------------------------------------------------------
# Host-side wrappers
# -----------------------------------------------------------------------------
def pack_params(conv_w, conv_b, fc1_w, fc1_b, fc2_w, fc2_b):
    """im2col-reshape the conv weight, pad K and all channel dims to 128, bf16 weights."""
    kh, kw, cin, cout = conv_w.shape
    dim_mlp = fc1_w.shape[1]
    out_dim = fc2_w.shape[1]
    k9 = kh * kw * cin
    kp = _round_up(k9, LANE)
    cp = _round_up(cout, LANE)
    mp = _round_up(dim_mlp, LANE)
    op = _round_up(out_dim, LANE)

    w9 = jnp.zeros((kp, cp), jnp.bfloat16)
    w9 = w9.at[:k9, :cout].set(conv_w.reshape(k9, cout).astype(jnp.bfloat16))
    bc = jnp.zeros((1, cp), jnp.float32).at[:, :cout].set(conv_b[None, :])
    w1 = jnp.zeros((cp, mp), jnp.bfloat16).at[:cout, :dim_mlp].set(
        fc1_w.astype(jnp.bfloat16))
    b1 = jnp.zeros((1, mp), jnp.float32).at[:, :dim_mlp].set(fc1_b[None, :])
    w2 = jnp.zeros((mp, op), jnp.bfloat16).at[:dim_mlp, :out_dim].set(
        fc2_w.astype(jnp.bfloat16))
    b2 = jnp.zeros((1, op), jnp.float32).at[:, :out_dim].set(fc2_b[None, :])
    return dict(w9=w9, bc=bc, w1=w1, b1=b1, w2=w2, b2=b2)


def mocov2_forward(x_nchw, packed, out_dim):
    # NCHW (PyTorch) -> NHWC, cast to bf16 on the host (halves DMA bytes), and
    # zero-pad spatially once so no in-kernel halo/padding machinery is needed.
    x = jnp.transpose(x_nchw, (0, 2, 3, 1)).astype(jnp.bfloat16)
    x = jnp.pad(x, ((0, 0), (1, 1), (1, 1), (0, 0)))
    n, hp2, wp2, cin = x.shape
    h, w = hp2 - 2, wp2 - 2

    w9, bc, w1, b1, w2, b2 = (packed[k] for k in ("w9", "bc", "w1", "b1", "w2", "b2"))
    kp, cp = w9.shape
    mp, op = b1.shape[1], b2.shape[1]
    assert kp >= 9 * cin

    kernel = functools.partial(_fused_kernel, inv_hw=1.0 / (h * w))

    out_padded = pl.pallas_call(
        kernel,
        out_shape=jax.ShapeDtypeStruct((n, 1, op), jnp.float32),
        grid_spec=pltpu.PrefetchScalarGridSpec(
            num_scalar_prefetch=0,
            grid=(n,),                                          # one whole image / step
            in_specs=[
                pl.BlockSpec((None, hp2, wp2, cin), lambda b: (b, 0, 0, 0)),  # image
                pl.BlockSpec((kp, cp), lambda b: (0, 0)),       # conv weight (im2col)
                pl.BlockSpec((1, cp), lambda b: (0, 0)),        # conv bias
                pl.BlockSpec((cp, mp), lambda b: (0, 0)),       # fc1 weight
                pl.BlockSpec((1, mp), lambda b: (0, 0)),        # fc1 bias
                pl.BlockSpec((mp, op), lambda b: (0, 0)),       # fc2 weight
                pl.BlockSpec((1, op), lambda b: (0, 0)),        # fc2 bias
            ],
            out_specs=pl.BlockSpec((None, 1, op), lambda b: (b, 0, 0)),
            scratch_shapes=[
                pltpu.VMEM((h, w, kp), jnp.bfloat16),           # im2col patches
            ],
        ),
        compiler_params=pltpu.CompilerParams(
            dimension_semantics=("parallel",),                  # megacore: split images
            # Sized within v7x's 64 MiB physical VMEM.  When scaling to a real trunk,
            # re-derive scratch/weight footprints here and consider
            # pipeline_mode=pl.Buffered(1) on the constant weight BlockSpecs.
            vmem_limit_bytes=32 * 1024 * 1024,
        ),
    )(x, w9, bc, w1, b1, w2, b2)

    return out_padded[:, 0, :out_dim]


# -----------------------------------------------------------------------------
# Pure-jnp reference mirroring the kernel math (bf16 operands, f32 accumulation)
# -----------------------------------------------------------------------------
def reference_forward(x_nchw, conv_w, conv_b, fc1_w, fc1_b, fc2_w, fc2_b):
    hp = jax.lax.Precision.HIGHEST
    bf = lambda a: a.astype(jnp.bfloat16).astype(jnp.float32)
    x = bf(jnp.transpose(x_nchw, (0, 2, 3, 1)).astype(jnp.float32))
    n, h, w, cin = x.shape
    cout = conv_w.shape[-1]
    xp = jnp.pad(x, ((0, 0), (1, 1), (1, 1), (0, 0)))
    wb = bf(conv_w)
    acc = jnp.zeros((n, h, w, cout), jnp.float32)
    for kh in range(3):
        for kw in range(3):
            acc = acc + jnp.einsum("nhwc,cf->nhwf",
                                   xp[:, kh:kh + h, kw:kw + w, :], wb[kh, kw],
                                   precision=hp)
    feat = jnp.maximum(acc + conv_b[None, None, None, :], 0.0)   # model.net(x)
    pooled = feat.mean(axis=(1, 2))                              # .mean(dim=[2,3])
    hid = jnp.maximum(jnp.dot(bf(pooled), bf(fc1_w), precision=hp) + fc1_b, 0.0)
    return jnp.dot(bf(hid), bf(fc2_w), precision=hp) + fc2_b     # model.fc(...)


if __name__ == "__main__":
    # Small shapes: batch=2, in-channels=4, 16x16 spatial, trunk feature dim=32,
    # dim_mlp=32 (original fc.out_features), out_dim=16.
    N, C_IN, H, W = 2, 4, 16, 16
    C_FEAT, DIM_MLP, OUT_DIM = 32, 32, 16

    key = jax.random.PRNGKey(0)
    ks = jax.random.split(key, 7)
    scale = 0.05
    x = jax.random.normal(ks[0], (N, C_IN, H, W), jnp.float32)    # PyTorch-style NCHW
    conv_w = scale * jax.random.normal(ks[1], (3, 3, C_IN, C_FEAT), jnp.float32)
    conv_b = scale * jax.random.normal(ks[2], (C_FEAT,), jnp.float32)
    fc1_w = scale * jax.random.normal(ks[3], (C_FEAT, DIM_MLP), jnp.float32)
    fc1_b = scale * jax.random.normal(ks[4], (DIM_MLP,), jnp.float32)
    fc2_w = scale * jax.random.normal(ks[5], (DIM_MLP, OUT_DIM), jnp.float32)
    fc2_b = scale * jax.random.normal(ks[6], (OUT_DIM,), jnp.float32)

    packed = pack_params(conv_w, conv_b, fc1_w, fc1_b, fc2_w, fc2_b)

    out = mocov2_forward(x, packed, OUT_DIM)
    out = jax.block_until_ready(out)
    assert out.shape == (N, OUT_DIM), out.shape
    assert bool(jnp.all(jnp.isfinite(out)))

    ref = reference_forward(x, conv_w, conv_b, fc1_w, fc1_b, fc2_w, fc2_b)
    max_err = float(jnp.max(jnp.abs(out - ref)))
    assert bool(jnp.allclose(out, ref, rtol=2e-2, atol=2e-3)), max_err

    print("KERNEL_OK")
</pallas_src>

<mosaic_0001>
module attributes {stable_mosaic.version = 11 : i64} {
  func.func @_fused_kernel(%arg0: i32, %arg1: memref<1x18x18x4xbf16, #tpu.memory_space<vmem>>, %arg2: memref<128x128xbf16, #tpu.memory_space<vmem>>, %arg3: memref<1x128xf32, #tpu.memory_space<vmem>>, %arg4: memref<128x128xbf16, #tpu.memory_space<vmem>>, %arg5: memref<1x128xf32, #tpu.memory_space<vmem>>, %arg6: memref<128x128xbf16, #tpu.memory_space<vmem>>, %arg7: memref<1x128xf32, #tpu.memory_space<vmem>>, %arg8: memref<1x1x128xf32, #tpu.memory_space<vmem>>, %arg9: memref<16x16x128xbf16, #tpu.memory_space<vmem>>) attributes {dimension_semantics = [#tpu.dimension_semantics<parallel>], iteration_bounds = array<i64: 2>, scalar_prefetch = 0 : i64, scratch_operands = 1 : i64, tpu.core_type = #tpu.core_type<tc>, window_params = [{transform_indices = @transform_0, window_bounds = array<i64: 1, 18, 18, 4>}, {pipeline_mode = #tpu.pipeline_mode<synchronous>, transform_indices = @transform_1, window_bounds = array<i64: 128, 128>}, {pipeline_mode = #tpu.pipeline_mode<synchronous>, transform_indices = @transform_2, window_bounds = array<i64: 1, 128>}, {pipeline_mode = #tpu.pipeline_mode<synchronous>, transform_indices = @transform_3, window_bounds = array<i64: 128, 128>}, {pipeline_mode = #tpu.pipeline_mode<synchronous>, transform_indices = @transform_4, window_bounds = array<i64: 1, 128>}, {pipeline_mode = #tpu.pipeline_mode<synchronous>, transform_indices = @transform_5, window_bounds = array<i64: 128, 128>}, {pipeline_mode = #tpu.pipeline_mode<synchronous>, transform_indices = @transform_6, window_bounds = array<i64: 1, 128>}, {transform_indices = @transform_7, window_bounds = array<i64: 1, 1, 128>}]} {
    %c0 = arith.constant 0 : index
    %c0_0 = arith.constant 0 : index
    %c0_1 = arith.constant 0 : index
    %c0_2 = arith.constant 0 : index
    %0 = vector.load %arg1[%c0, %c0_0, %c0_1, %c0_2] : memref<1x18x18x4xbf16, #tpu.memory_space<vmem>>, vector<1x18x18x4xbf16>
    %1 = vector.shape_cast %0 : vector<1x18x18x4xbf16> to vector<18x18x4xbf16>
    %cst = arith.constant 0.000000e+00 : bf16
    %2 = vector.broadcast %cst : bf16 to vector<16x16x128xbf16>
    %c0_3 = arith.constant 0 : index
    %c0_4 = arith.constant 0 : index
    %c0_5 = arith.constant 0 : index
    %3 = vector.load %arg9[%c0_3, %c0_4, %c0_5] : memref<16x16x128xbf16, #tpu.memory_space<vmem>>, vector<16x16x128xbf16>
    tpu.vector_store %arg9[%c0_3, %c0_4, %c0_5], %2 {strides = array<i32>} : memref<16x16x128xbf16, #tpu.memory_space<vmem>>, vector<16x16x128xbf16>,
    %4 = vector.extract_strided_slice %1 {offsets = [0, 0, 0], sizes = [16, 16, 4], strides = [1, 1, 1]} : vector<18x18x4xbf16> to vector<16x16x4xbf16>
    %c0_6 = arith.constant 0 : index
    %c0_7 = arith.constant 0 : index
    %c0_8 = arith.constant 0 : index
    %5 = vector.load %arg9[%c0_6, %c0_7, %c0_8] : memref<16x16x128xbf16, #tpu.memory_space<vmem>>, vector<16x16x4xbf16>
    tpu.vector_store %arg9[%c0_6, %c0_7, %c0_8], %4 {strides = array<i32>} : memref<16x16x128xbf16, #tpu.memory_space<vmem>>, vector<16x16x4xbf16>,
    %6 = vector.extract_strided_slice %1 {offsets = [0, 1, 0], sizes = [16, 16, 4], strides = [1, 1, 1]} : vector<18x18x4xbf16> to vector<16x16x4xbf16>
    %c0_9 = arith.constant 0 : index
    %c0_10 = arith.constant 0 : index
    %c4 = arith.constant 4 : index
    %7 = vector.load %arg9[%c0_9, %c0_10, %c4] : memref<16x16x128xbf16, #tpu.memory_space<vmem>>, vector<16x16x4xbf16>
    tpu.vector_store %arg9[%c0_9, %c0_10, %c4], %6 {strides = array<i32>} : memref<16x16x128xbf16, #tpu.memory_space<vmem>>, vector<16x16x4xbf16>,
    %8 = vector.extract_strided_slice %1 {offsets = [0, 2, 0], sizes = [16, 16, 4], strides = [1, 1, 1]} : vector<18x18x4xbf16> to vector<16x16x4xbf16>
    %c0_11 = arith.constant 0 : index
    %c0_12 = arith.constant 0 : index
    %c8 = arith.constant 8 : index
    %9 = vector.load %arg9[%c0_11, %c0_12, %c8] : memref<16x16x128xbf16, #tpu.memory_space<vmem>>, vector<16x16x4xbf16>
    tpu.vector_store %arg9[%c0_11, %c0_12, %c8], %8 {strides = array<i32>} : memref<16x16x128xbf16, #tpu.memory_space<vmem>>, vector<16x16x4xbf16>,
    %10 = vector.extract_strided_slice %1 {offsets = [1, 0, 0], sizes = [16, 16, 4], strides = [1, 1, 1]} : vector<18x18x4xbf16> to vector<16x16x4xbf16>
    %c0_13 = arith.constant 0 : index
    %c0_14 = arith.constant 0 : index
    %c12 = arith.constant 12 : index
    %11 = vector.load %arg9[%c0_13, %c0_14, %c12] : memref<16x16x128xbf16, #tpu.memory_space<vmem>>, vector<16x16x4xbf16>
    tpu.vector_store %arg9[%c0_13, %c0_14, %c12], %10 {strides = array<i32>} : memref<16x16x128xbf16, #tpu.memory_space<vmem>>, vector<16x16x4xbf16>,
    %12 = vector.extract_strided_slice %1 {offsets = [1, 1, 0], sizes = [16, 16, 4], strides = [1, 1, 1]} : vector<18x18x4xbf16> to vector<16x16x4xbf16>
    %c0_15 = arith.constant 0 : index
    %c0_16 = arith.constant 0 : index
    %c16 = arith.constant 16 : index
    %13 = vector.load %arg9[%c0_15, %c0_16, %c16] : memref<16x16x128xbf16, #tpu.memory_space<vmem>>, vector<16x16x4xbf16>
    tpu.vector_store %arg9[%c0_15, %c0_16, %c16], %12 {strides = array<i32>} : memref<16x16x128xbf16, #tpu.memory_space<vmem>>, vector<16x16x4xbf16>,
    %14 = vector.extract_strided_slice %1 {offsets = [1, 2, 0], sizes = [16, 16, 4], strides = [1, 1, 1]} : vector<18x18x4xbf16> to vector<16x16x4xbf16>
    %c0_17 = arith.constant 0 : index
    %c0_18 = arith.constant 0 : index
    %c20 = arith.constant 20 : index
    %15 = vector.load %arg9[%c0_17, %c0_18, %c20] : memref<16x16x128xbf16, #tpu.memory_space<vmem>>, vector<16x16x4xbf16>
    tpu.vector_store %arg9[%c0_17, %c0_18, %c20], %14 {strides = array<i32>} : memref<16x16x128xbf16, #tpu.memory_space<vmem>>, vector<16x16x4xbf16>,
    %16 = vector.extract_strided_slice %1 {offsets = [2, 0, 0], sizes = [16, 16, 4], strides = [1, 1, 1]} : vector<18x18x4xbf16> to vector<16x16x4xbf16>
    %c0_19 = arith.constant 0 : index
    %c0_20 = arith.constant 0 : index
    %c24 = arith.constant 24 : index
    %17 = vector.load %arg9[%c0_19, %c0_20, %c24] : memref<16x16x128xbf16, #tpu.memory_space<vmem>>, vector<16x16x4xbf16>
    tpu.vector_store %arg9[%c0_19, %c0_20, %c24], %16 {strides = array<i32>} : memref<16x16x128xbf16, #tpu.memory_space<vmem>>, vector<16x16x4xbf16>,
    %18 = vector.extract_strided_slice %1 {offsets = [2, 1, 0], sizes = [16, 16, 4], strides = [1, 1, 1]} : vector<18x18x4xbf16> to vector<16x16x4xbf16>
    %c0_21 = arith.constant 0 : index
    %c0_22 = arith.constant 0 : index
    %c28 = arith.constant 28 : index
    %19 = vector.load %arg9[%c0_21, %c0_22, %c28] : memref<16x16x128xbf16, #tpu.memory_space<vmem>>, vector<16x16x4xbf16>
    tpu.vector_store %arg9[%c0_21, %c0_22, %c28], %18 {strides = array<i32>} : memref<16x16x128xbf16, #tpu.memory_space<vmem>>, vector<16x16x4xbf16>,
    %20 = vector.extract_strided_slice %1 {offsets = [2, 2, 0], sizes = [16, 16, 4], strides = [1, 1, 1]} : vector<18x18x4xbf16> to vector<16x16x4xbf16>
    %c0_23 = arith.constant 0 : index
    %c0_24 = arith.constant 0 : index
    %c32 = arith.constant 32 : index
    %21 = vector.load %arg9[%c0_23, %c0_24, %c32] : memref<16x16x128xbf16, #tpu.memory_space<vmem>>, vector<16x16x4xbf16>
    tpu.vector_store %arg9[%c0_23, %c0_24, %c32], %20 {strides = array<i32>} : memref<16x16x128xbf16, #tpu.memory_space<vmem>>, vector<16x16x4xbf16>,
    %c0_25 = arith.constant 0 : index
    %c0_26 = arith.constant 0 : index
    %c0_27 = arith.constant 0 : index
    %22 = vector.load %arg9[%c0_25, %c0_26, %c0_27] : memref<16x16x128xbf16, #tpu.memory_space<vmem>>, vector<16x16x128xbf16>
    %23 = vector.shape_cast %22 : vector<16x16x128xbf16> to vector<256x128xbf16>
    %c0_28 = arith.constant 0 : index
    %c0_29 = arith.constant 0 : index
    %24 = vector.load %arg2[%c0_28, %c0_29] : memref<128x128xbf16, #tpu.memory_space<vmem>>, vector<128x128xbf16>
    %cst_30 = arith.constant dense<0.000000e+00> : vector<256x128xf32>
    %25 = tpu.matmul %23, %24, %cst_30 {dimension_numbers = #tpu.dot_dimension_numbers<[1], [0], [0], [1], [0, 0, 1, 1], [], []>} : vector<256x128xbf16>, vector<128x128xbf16>, vector<256x128xf32> -> vector<256x128xf32>
    %c0_31 = arith.constant 0 : index
    %c0_32 = arith.constant 0 : index
    %26 = vector.load %arg3[%c0_31, %c0_32] : memref<1x128xf32, #tpu.memory_space<vmem>>, vector<1x128xf32>
    %27 = vector.broadcast %26 : vector<1x128xf32> to vector<256x128xf32>
    %28 = arith.addf %25, %27 : vector<256x128xf32>
    %cst_33 = arith.constant 0.000000e+00 : f32
    %29 = vector.broadcast %cst_33 : f32 to vector<256x128xf32>
    %30 = arith.maximumf %28, %29 : vector<256x128xf32>
    %cst_34 = arith.constant dense<0.000000e+00> : vector<128xf32>
    %31 = vector.multi_reduction <add>, %30, %cst_34 [0] : vector<256x128xf32> to vector<128xf32>
    %32 = vector.shape_cast %31 : vector<128xf32> to vector<1x128xf32>
    %cst_35 = arith.constant 3.906250e-03 : f32
    %33 = vector.broadcast %cst_35 : f32 to vector<1x128xf32>
    %34 = arith.mulf %32, %33 : vector<1x128xf32>
    %35 = arith.truncf %34 : vector<1x128xf32> to vector<1x128xbf16>
    %c0_36 = arith.constant 0 : index
    %c0_37 = arith.constant 0 : index
    %36 = vector.load %arg4[%c0_36, %c0_37] : memref<128x128xbf16, #tpu.memory_space<vmem>>, vector<128x128xbf16>
    %cst_38 = arith.constant dense<0.000000e+00> : vector<1x128xf32>
    %37 = tpu.matmul %35, %36, %cst_38 {dimension_numbers = #tpu.dot_dimension_numbers<[1], [0], [0], [1], [0, 0, 1, 1], [], []>} : vector<1x128xbf16>, vector<128x128xbf16>, vector<1x128xf32> -> vector<1x128xf32>
    %c0_39 = arith.constant 0 : index
    %c0_40 = arith.constant 0 : index
    %38 = vector.load %arg5[%c0_39, %c0_40] : memref<1x128xf32, #tpu.memory_space<vmem>>, vector<1x128xf32>
    %39 = arith.addf %37, %38 : vector<1x128xf32>
    %cst_41 = arith.constant 0.000000e+00 : f32
    %40 = vector.broadcast %cst_41 : f32 to vector<1x128xf32>
    %41 = arith.maximumf %39, %40 : vector<1x128xf32>
    %42 = arith.truncf %41 : vector<1x128xf32> to vector<1x128xbf16>
    %c0_42 = arith.constant 0 : index
    %c0_43 = arith.constant 0 : index
    %43 = vector.load %arg6[%c0_42, %c0_43] : memref<128x128xbf16, #tpu.memory_space<vmem>>, vector<128x128xbf16>
    %cst_44 = arith.constant dense<0.000000e+00> : vector<1x128xf32>
    %44 = tpu.matmul %42, %43, %cst_44 {dimension_numbers = #tpu.dot_dimension_numbers<[1], [0], [0], [1], [0, 0, 1, 1], [], []>} : vector<1x128xbf16>, vector<128x128xbf16>, vector<1x128xf32> -> vector<1x128xf32>
    %c0_45 = arith.constant 0 : index
    %c0_46 = arith.constant 0 : index
    %45 = vector.load %arg7[%c0_45, %c0_46] : memref<1x128xf32, #tpu.memory_space<vmem>>, vector<1x128xf32>
    %46 = arith.addf %44, %45 : vector<1x128xf32>
    %c0_47 = arith.constant 0 : index
    %c0_48 = arith.constant 0 : index
    %c0_49 = arith.constant 0 : index
    %47 = vector.load %arg8[%c0_47, %c0_48, %c0_49] : memref<1x1x128xf32, #tpu.memory_space<vmem>>, vector<1x1x128xf32>
    %48 = vector.shape_cast %47 : vector<1x1x128xf32> to vector<1x128xf32>
    %49 = vector.shape_cast %46 : vector<1x128xf32> to vector<1x1x128xf32>
    tpu.vector_store %arg8[%c0_47, %c0_48, %c0_49], %49 {strides = array<i32>} : memref<1x1x128xf32, #tpu.memory_space<vmem>>, vector<1x1x128xf32>,
    return
  }
  func.func @transform_0(%arg0: i32) -> (i32, i32, i32, i32) {
    %c0_i32 = arith.constant 0 : i32
    %c0_i32_0 = arith.constant 0 : i32
    %c0_i32_1 = arith.constant 0 : i32
    %c0_i32_2 = arith.constant 0 : i32
    return %arg0, %c0_i32, %c0_i32_0, %c0_i32_1 : i32, i32, i32, i32
  }
  func.func @transform_1(%arg0: i32) -> (i32, i32) {
    %c0_i32 = arith.constant 0 : i32
    %c0_i32_0 = arith.constant 0 : i32
    %c0_i32_1 = arith.constant 0 : i32
    return %c0_i32, %c0_i32_0 : i32, i32
  }
  func.func @transform_2(%arg0: i32) -> (i32, i32) {
    %c0_i32 = arith.constant 0 : i32
    %c0_i32_0 = arith.constant 0 : i32
    %c0_i32_1 = arith.constant 0 : i32
    return %c0_i32, %c0_i32_0 : i32, i32
  }
  func.func @transform_3(%arg0: i32) -> (i32, i32) {
    %c0_i32 = arith.constant 0 : i32
    %c0_i32_0 = arith.constant 0 : i32
    %c0_i32_1 = arith.constant 0 : i32
    return %c0_i32, %c0_i32_0 : i32, i32
  }
  func.func @transform_4(%arg0: i32) -> (i32, i32) {
    %c0_i32 = arith.constant 0 : i32
    %c0_i32_0 = arith.constant 0 : i32
    %c0_i32_1 = arith.constant 0 : i32
    return %c0_i32, %c0_i32_0 : i32, i32
  }
  func.func @transform_5(%arg0: i32) -> (i32, i32) {
    %c0_i32 = arith.constant 0 : i32
    %c0_i32_0 = arith.constant 0 : i32
    %c0_i32_1 = arith.constant 0 : i32
    return %c0_i32, %c0_i32_0 : i32, i32
  }
  func.func @transform_6(%arg0: i32) -> (i32, i32) {
    %c0_i32 = arith.constant 0 : i32
    %c0_i32_0 = arith.constant 0 : i32
    %c0_i32_1 = arith.constant 0 : i32
    return %c0_i32, %c0_i32_0 : i32, i32
  }
  func.func @transform_7(%arg0: i32) -> (i32, i32, i32) {
    %c0_i32 = arith.constant 0 : i32
    %c0_i32_0 = arith.constant 0 : i32
    %c0_i32_1 = arith.constant 0 : i32
    return %arg0, %c0_i32, %c0_i32_0 : i32, i32, i32
  }
}

</mosaic_0001>

<llo_original>
// kernel: tpu_custom_call.1
$region0: #{tpu_custom_call.1}
  #allocation0 [shape = 'u32[]', space=smem, size = 0x4, offset = 0x4, fixed_abs, tag = 'smem constant byte address 0x4 - core index']
  #allocation1 [shape = 'u32[144,128]{1,0:T(1,128)}', space=vmem, size = 0x12000, scoped, tag = 'internal scratch']
  #allocation2 [shape = 'bf16[16,16,128]{2,1,0:T(8,128)(2,1)}', space=vmem, size = 0x10000, scoped, tag = 'scratch operand']
  %s0 = inlined_call_operand.vmem [shape: bf16[2,18,18,4], index: 0, kind: input, shape index: {}]
  %s1 = inlined_call_operand.vmem [shape: bf16[128,128], index: 1, kind: input, shape index: {}]
  %s2 = inlined_call_operand.vmem [shape: f32[1,128], index: 2, kind: input, shape index: {}]
  %s3 = inlined_call_operand.vmem [shape: bf16[128,128], index: 3, kind: input, shape index: {}]
  %s4 = inlined_call_operand.vmem [shape: f32[1,128], index: 4, kind: input, shape index: {}]
  %s5 = inlined_call_operand.vmem [shape: bf16[128,128], index: 5, kind: input, shape index: {}]
  %s6 = inlined_call_operand.vmem [shape: f32[1,128], index: 6, kind: input, shape index: {}]
  %s7 = inlined_call_operand.hbm [shape: f32[2,1,128], index: 7, kind: output, shape index: {}]
  %s8 = sld [smem:[#allocation0]]
  $region61: #{tpu_custom_call.1} parent=0
    _
  %s10 = ssub.s32 1, %s8
  %s11 = scalar_select 0, %s10, %s8
  $region1: #{tpu_custom_call.1} parent=0
    #allocation3 [shape = 'u8[1024]{0}', space=vmem, size = 0x400, scoped, tag = 'output window, operand 0']
    #allocation4 [shape = 's32[2]{0}', space=sflag, size = 0x8, scoped, tag = 'scoped memory for tpu_custom_call.1']
    %12 = vsyncpa [#allocation4], 0
    %s13 = scalar_lea.sflag [#allocation4], 1
    %14 = vsyncpa %s13, 0
    loop: start=0, step=1, limit=4
    $region2: #{tpu_custom_call.1} parent=1 // loop_pre_header
      _
    $region3: #{tpu_custom_call.1} parent=1 // loop_header
      %s16 = sphi 0, %s20
      %p17 = scmp.ge.s32.totalorder %s16, 4
      %s26 = sphi 0, %s28
      %s29 = sphi 0, %s26
      %s30 = sphi 0, %s29
      %s46 = sphi 0, %s30
      %s50 = sphi 0, %s50
      %s52 = sphi 0, %s50
      %s53 = sphi 0, %s52
      %s67 = sphi 0, %s53
      %s71 = sphi 0, %s71
      %s73 = sphi 0, %s71
      %s74 = sphi 0, %s73
      %s88 = sphi 0, %s74
      %s92 = sphi 0, %s92
      %s94 = sphi 0, %s92
      %s95 = sphi 0, %s94
      %s109 = sphi 0, %s95
      %s113 = sphi 0, %s113
      %s115 = sphi 0, %s113
      %s116 = sphi 0, %s115
      %s130 = sphi 0, %s116
      %s134 = sphi 0, %s134
      %s136 = sphi 0, %s134
      %s137 = sphi 0, %s136
      %s151 = sphi 0, %s137
      %s155 = sphi 0, %s155
      %s157 = sphi 0, %s155
      %s158 = sphi 0, %s157
      %s172 = sphi 0, %s158
      %s178 = sphi 0, %s180
      %s181 = sphi 0, %s178
      %s182 = sphi 0, %s181
      %s198 = sphi 0, %s182
    $region4: #{tpu_custom_call.1} parent=1 // loop_header_branch
      %19 = sbr.rel (%p17) target = $region8
    $region5: #{tpu_custom_call.1} parent=1 // loop_body
      %s21 = ssub.s32 %s16, 1
      %s22 = ssub.s32 %s16, 2
      %s23 = sadd.s32 %s16, 1
      %s24 = ssub.s32 %s16, %s23
      %p25 = scmp.eq.s32.totalorder %s24, 0
      %s27 = sadd.s32 %s26, 1
      %s28 = scalar_select %p25, %s26, %s27
      %p31 = pneg %p25
      %p32 = scmp.eq.s32.totalorder %s16, 1
      %p33 = por %p31, %p32
      %p34 = scmp.ne.s32.totalorder %s26, %s29
      %p35 = scmp.eq.s32.totalorder %s16, 0
      %p36 = por %p34, %p35
      %p37 = scmp.ne.s32.totalorder %s26, %s29
      %p38 = scmp.eq.s32.totalorder %s21, 1
      %p39 = por %p37, %p38
      %p40 = scmp.ne.s32.totalorder %s29, %s30
      %p41 = scmp.eq.s32.totalorder %s21, 0
      %p42 = por %p40, %p41
      %p43 = scmp.ne.s32.totalorder %s29, %s30
      %p44 = scmp.eq.s32.totalorder %s22, 1
      %p45 = por %p43, %p44
      %p47 = scmp.ne.s32.totalorder %s30, %s46
      %p48 = scmp.eq.s32.totalorder %s22, 0
      %p49 = por %p47, %p48
      %s51 = sadd.s32 %s50, 1
      %p54 = scmp.eq.s32.totalorder %s16, 1
      %p55 = scmp.ne.s32.totalorder %s50, %s52
      %p56 = scmp.eq.s32.totalorder %s16, 0
      %p57 = por %p55, %p56
      %p58 = scmp.ne.s32.totalorder %s50, %s52
      %p59 = scmp.eq.s32.totalorder %s21, 1
      %p60 = por %p58, %p59
      %p61 = scmp.ne.s32.totalorder %s52, %s53
      %p62 = scmp.eq.s32.totalorder %s21, 0
      %p63 = por %p61, %p62
      %p64 = scmp.ne.s32.totalorder %s52, %s53
      %p65 = scmp.eq.s32.totalorder %s22, 1
      %p66 = por %p64, %p65
      %p68 = scmp.ne.s32.totalorder %s53, %s67
      %p69 = scmp.eq.s32.totalorder %s22, 0
      %p70 = por %p68, %p69
      %s72 = sadd.s32 %s71, 1
      %p75 = scmp.eq.s32.totalorder %s16, 1
      %p76 = scmp.ne.s32.totalorder %s71, %s73
      %p77 = scmp.eq.s32.totalorder %s16, 0
      %p78 = por %p76, %p77
      %p79 = scmp.ne.s32.totalorder %s71, %s73
      %p80 = scmp.eq.s32.totalorder %s21, 1
      %p81 = por %p79, %p80
      %p82 = scmp.ne.s32.totalorder %s73, %s74
      %p83 = scmp.eq.s32.totalorder %s21, 0
      %p84 = por %p82, %p83
      %p85 = scmp.ne.s32.totalorder %s73, %s74
      %p86 = scmp.eq.s32.totalorder %s22, 1
      %p87 = por %p85, %p86
      %p89 = scmp.ne.s32.totalorder %s74, %s88
      %p90 = scmp.eq.s32.totalorder %s22, 0
      %p91 = por %p89, %p90
      %s93 = sadd.s32 %s92, 1
      %p96 = scmp.eq.s32.totalorder %s16, 1
      %p97 = scmp.ne.s32.totalorder %s92, %s94
      %p98 = scmp.eq.s32.totalorder %s16, 0
      %p99 = por %p97, %p98
      %p100 = scmp.ne.s32.totalorder %s92, %s94
      %p101 = scmp.eq.s32.totalorder %s21, 1
      %p102 = por %p100, %p101
      %p103 = scmp.ne.s32.totalorder %s94, %s95
      %p104 = scmp.eq.s32.totalorder %s21, 0
      %p105 = por %p103, %p104
      %p106 = scmp.ne.s32.totalorder %s94, %s95
      %p107 = scmp.eq.s32.totalorder %s22, 1
      %p108 = por %p106, %p107
      %p110 = scmp.ne.s32.totalorder %s95, %s109
      %p111 = scmp.eq.s32.totalorder %s22, 0
      %p112 = por %p110, %p111
      %s114 = sadd.s32 %s113, 1
      %p117 = scmp.eq.s32.totalorder %s16, 1
      %p118 = scmp.ne.s32.totalorder %s113, %s115
      %p119 = scmp.eq.s32.totalorder %s16, 0
      %p120 = por %p118, %p119
      %p121 = scmp.ne.s32.totalorder %s113, %s115
      %p122 = scmp.eq.s32.totalorder %s21, 1
      %p123 = por %p121, %p122
      %p124 = scmp.ne.s32.totalorder %s115, %s116
      %p125 = scmp.eq.s32.totalorder %s21, 0
      %p126 = por %p124, %p125
      %p127 = scmp.ne.s32.totalorder %s115, %s116
      %p128 = scmp.eq.s32.totalorder %s22, 1
      %p129 = por %p127, %p128
      %p131 = scmp.ne.s32.totalorder %s116, %s130
      %p132 = scmp.eq.s32.totalorder %s22, 0
      %p133 = por %p131, %p132
      %s135 = sadd.s32 %s134, 1
      %p138 = scmp.eq.s32.totalorder %s16, 1
      %p139 = scmp.ne.s32.totalorder %s134, %s136
      %p140 = scmp.eq.s32.totalorder %s16, 0
      %p141 = por %p139, %p140
      %p142 = scmp.ne.s32.totalorder %s134, %s136
      %p143 = scmp.eq.s32.totalorder %s21, 1
      %p144 = por %p142, %p143
      %p145 = scmp.ne.s32.totalorder %s136, %s137
      %p146 = scmp.eq.s32.totalorder %s21, 0
      %p147 = por %p145, %p146
      %p148 = scmp.ne.s32.totalorder %s136, %s137
      %p149 = scmp.eq.s32.totalorder %s22, 1
      %p150 = por %p148, %p149
      %p152 = scmp.ne.s32.totalorder %s137, %s151
      %p153 = scmp.eq.s32.totalorder %s22, 0
      %p154 = por %p152, %p153
      %s156 = sadd.s32 %s155, 1
      %p159 = scmp.eq.s32.totalorder %s16, 1
      %p160 = scmp.ne.s32.totalorder %s155, %s157
      %p161 = scmp.eq.s32.totalorder %s16, 0
      %p162 = por %p160, %p161
      %p163 = scmp.ne.s32.totalorder %s155, %s157
      %p164 = scmp.eq.s32.totalorder %s21, 1
      %p165 = por %p163, %p164
      %p166 = scmp.ne.s32.totalorder %s157, %s158
      %p167 = scmp.eq.s32.totalorder %s21, 0
      %p168 = por %p166, %p167
      %p169 = scmp.ne.s32.totalorder %s157, %s158
      %p170 = scmp.eq.s32.totalorder %s22, 1
      %p171 = por %p169, %p170
      %p173 = scmp.ne.s32.totalorder %s158, %s172
      %p174 = scmp.eq.s32.totalorder %s22, 0
      %p175 = por %p173, %p174
      %s176 = ssub.s32 %s16, %s23
      %p177 = scmp.eq.s32.totalorder %s176, 0
      %s179 = sadd.s32 %s178, 1
      %s180 = scalar_select %p177, %s178, %s179
      %p183 = pneg %p177
      %p184 = scmp.eq.s32.totalorder %s16, 1
      %p185 = por %p183, %p184
      %p186 = scmp.ne.s32.totalorder %s178, %s181
      %p187 = scmp.eq.s32.totalorder %s16, 0
      %p188 = por %p186, %p187
      %p189 = scmp.ne.s32.totalorder %s178, %s181
      %p190 = scmp.eq.s32.totalorder %s21, 1
      %p191 = por %p189, %p190
      %p192 = scmp.ne.s32.totalorder %s181, %s182
      %p193 = scmp.eq.s32.totalorder %s21, 0
      %p194 = por %p192, %p193
      %p195 = scmp.ne.s32.totalorder %s181, %s182
      %p196 = scmp.eq.s32.totalorder %s22, 1
      %p197 = por %p195, %p196
      %p199 = scmp.ne.s32.totalorder %s182, %s198
      %p200 = scmp.eq.s32.totalorder %s22, 0
      %p201 = por %p199, %p200
      %p202 = scmp.le.s32.totalorder 1, %s16
      %p203 = scmp.lt.s32.totalorder %s16, 3
      %p204 = pnand %p202, %p203
      %p205 = pneg %p204
      // Predicated region
      $region9: #{tpu_custom_call.1} parent=5 // pred_check
        _
      $region10: #{tpu_custom_call.1} parent=5 // pred_check_branch
        %207 = sbr.rel (%p204) target = $region12
      $region11: #{tpu_custom_call.1} parent=5 // pred_region
        %s208 = ssub.s32 %s16, 1
        // Predicated region
        $region13: #{tpu_custom_call.1} parent=11 // pred_check
          %p209 = pneg %p63
        $region14: #{tpu_custom_call.1} parent=11 // pred_check_branch
          %211 = sbr.rel (%p209) target = $region16
        $region15: #{tpu_custom_call.1} parent=11 // pred_region
          _
        $region16: #{tpu_custom_call.1} parent=11 // pred_fallthru
          _
        // Predicated region
        $region17: #{tpu_custom_call.1} parent=11 // pred_check
          %p212 = pneg %p84
        $region18: #{tpu_custom_call.1} parent=11 // pred_check_branch
          %214 = sbr.rel (%p212) target = $region20
        $region19: #{tpu_custom_call.1} parent=11 // pred_region
          _
        $region20: #{tpu_custom_call.1} parent=11 // pred_fallthru
          _
        // Predicated region
        $region21: #{tpu_custom_call.1} parent=11 // pred_check
          %p215 = pneg %p105
        $region22: #{tpu_custom_call.1} parent=11 // pred_check_branch
          %217 = sbr.rel (%p215) target = $region24
        $region23: #{tpu_custom_call.1} parent=11 // pred_region
          _
        $region24: #{tpu_custom_call.1} parent=11 // pred_fallthru
          _
        // Predicated region
        $region25: #{tpu_custom_call.1} parent=11 // pred_check
          %p218 = pneg %p126
        $region26: #{tpu_custom_call.1} parent=11 // pred_check_branch
          %220 = sbr.rel (%p218) target = $region28
        $region27: #{tpu_custom_call.1} parent=11 // pred_region
          _
        $region28: #{tpu_custom_call.1} parent=11 // pred_fallthru
          _
        // Predicated region
        $region29: #{tpu_custom_call.1} parent=11 // pred_check
          %p221 = pneg %p147
        $region30: #{tpu_custom_call.1} parent=11 // pred_check_branch
          %223 = sbr.rel (%p221) target = $region32
        $region31: #{tpu_custom_call.1} parent=11 // pred_region
          _
        $region32: #{tpu_custom_call.1} parent=11 // pred_fallthru
          _
        // Predicated region
        $region33: #{tpu_custom_call.1} parent=11 // pred_check
          %p224 = pneg %p168
        $region34: #{tpu_custom_call.1} parent=11 // pred_check_branch
          %226 = sbr.rel (%p224) target = $region36
        $region35: #{tpu_custom_call.1} parent=11 // pred_region
          _
        $region36: #{tpu_custom_call.1} parent=11 // pred_fallthru
          _
      $region12: #{tpu_custom_call.1} parent=5 // pred_fallthru
        _
      %p227 = scmp.lt.s32.totalorder %s16, 2
      // Predicated region
      $region37: #{tpu_custom_call.1} parent=5 // pred_check
        %p228 = pneg %p227
      $region38: #{tpu_custom_call.1} parent=5 // pred_check_branch
        %230 = sbr.rel (%p228) target = $region40
      $region39: #{tpu_custom_call.1} parent=5 // pred_region
        // Predicated region
        $region41: #{tpu_custom_call.1} parent=39 // pred_check
          %p231 = pneg %p36
        $region42: #{tpu_custom_call.1} parent=39 // pred_check_branch
          %233 = sbr.rel (%p231) target = $region44
        $region43: #{tpu_custom_call.1} parent=39 // pred_region
          %p234 = scmp.lt.s32.totalorder %s16, 1
          %s235 = scalar_select %p234, %s16, 1
          %s236 = smul.addr %s235, 54
          %s237 = smul.addr %s236, 4
          %s238 = scalar_lea.vmem %s0, %s237
        $region44: #{tpu_custom_call.1} parent=39 // pred_fallthru
          _
      $region40: #{tpu_custom_call.1} parent=5 // pred_fallthru
        _
      %p239 = scmp.le.s32.totalorder 1, %s16
      %p240 = scmp.lt.s32.totalorder %s16, 3
      %p241 = pnand %p239, %p240
      %p242 = pneg %p241
      // Predicated region
      $region45: #{tpu_custom_call.1} parent=5 // pred_check
        _
      $region46: #{tpu_custom_call.1} parent=5 // pred_check_branch
        %244 = sbr.rel (%p241) target = $region48
      $region47: #{tpu_custom_call.1} parent=5 // pred_region
        %s245 = ssub.s32 %s16, 1
        %p246 = scmp.lt.s32.totalorder %s21, 1
        %s247 = scalar_select %p246, %s21, 1
        %s248 = smul.addr %s247, 54
        %s249 = smul.addr %s248, 4
        %s250 = scalar_lea.vmem %s0, %s249
        %p251 = pneg %p42
        %p252 = pneg %p39
        %p253 = pneg %p63
        %p254 = pneg %p60
        %p255 = pneg %p84
        %p256 = pneg %p81
        %p257 = pneg %p105
        %p258 = pneg %p102
        %p259 = pneg %p126
        %p260 = pneg %p123
        %p261 = pneg %p147
        %p262 = pneg %p144
        %p263 = pneg %p168
        %p264 = pneg %p165
        %p265 = pneg %p194
        %p266 = pneg %p191
        %s267 = sand.u32 %s181, 1
        %s268 = scalar_lea.sflag [#allocation4], %s267
        %s269 = sand.u32 %s181, 1
        %s270 = scalar_lea.vmem [#allocation3], %s269
        %p271 = scmp.lt.s32.totalorder %s21, 1
        %s272 = scalar_select %p271, %s21, 1
        %s273 = smul.addr %s272, 54
        %s274 = smul.addr %s273, 4
        %s275 = scalar_lea.vmem %s0, %s274
        %v277 = vld [vmem:[%s275] sm:$0xf]
        %v278 = vld [vmem:[%s275 + $0x4] sm:$0xf]
        %v279 = vld [vmem:[%s275 + $0x8] sm:$0x1]
        %v280 = vld [vmem:[%s275 + $0xc] sm:$0xf]
        %v281 = vld [vmem:[%s275 + $0x10] sm:$0xf]
        %v282 = vld [vmem:[%s275 + $0x14] sm:$0x1]
        %v283 = vld [vmem:[%s275 + $0x18] sm:$0xf]
        %v284 = vld [vmem:[%s275 + $0x1c] sm:$0xf]
        %v285 = vld [vmem:[%s275 + $0x20] sm:$0x1]
        %v286 = vld [vmem:[%s275 + $0x24] sm:$0xf]
        %v287 = vld [vmem:[%s275 + $0x28] sm:$0xf]
        %v288 = vld [vmem:[%s275 + $0x2c] sm:$0x1]
        %v289 = vld [vmem:[%s275 + $0x30] sm:$0xf]
        %v290 = vld [vmem:[%s275 + $0x34] sm:$0xf]
        %v291 = vld [vmem:[%s275 + $0x38] sm:$0x1]
        %v292 = vld [vmem:[%s275 + $0x3c] sm:$0xf]
        %v293 = vld [vmem:[%s275 + $0x40] sm:$0xf]
        %v294 = vld [vmem:[%s275 + $0x44] sm:$0x1]
        %v295 = vld [vmem:[%s275 + $0x48] sm:$0xf]
        %v296 = vld [vmem:[%s275 + $0x4c] sm:$0xf]
        %v297 = vld [vmem:[%s275 + $0x50] sm:$0x1]
        %v298 = vld [vmem:[%s275 + $0x54] sm:$0xf]
        %v299 = vld [vmem:[%s275 + $0x58] sm:$0xf]
        %v300 = vld [vmem:[%s275 + $0x5c] sm:$0x1]
        %v301 = vld [vmem:[%s275 + $0x60] sm:$0xf]
        %v302 = vld [vmem:[%s275 + $0x64] sm:$0xf]
        %v303 = vld [vmem:[%s275 + $0x68] sm:$0x1]
        %v304 = vld [vmem:[%s275 + $0x6c] sm:$0xf]
        %v305 = vld [vmem:[%s275 + $0x70] sm:$0xf]
        %v306 = vld [vmem:[%s275 + $0x74] sm:$0x1]
        %v307 = vld [vmem:[%s275 + $0x78] sm:$0xf]
        %v308 = vld [vmem:[%s275 + $0x7c] sm:$0xf]
        %v309 = vld [vmem:[%s275 + $0x80] sm:$0x1]
        %v310 = vld [vmem:[%s275 + $0x84] sm:$0xf]
        %v311 = vld [vmem:[%s275 + $0x88] sm:$0xf]
        %v312 = vld [vmem:[%s275 + $0x8c] sm:$0x1]
        %v313 = vld [vmem:[%s275 + $0x90] sm:$0xf]
        %v314 = vld [vmem:[%s275 + $0x94] sm:$0xf]
        %v315 = vld [vmem:[%s275 + $0x98] sm:$0x1]
        %v316 = vld [vmem:[%s275 + $0x9c] sm:$0xf]
        %v317 = vld [vmem:[%s275 + $0xa0] sm:$0xf]
        %v318 = vld [vmem:[%s275 + $0xa4] sm:$0x1]
        %v319 = vld [vmem:[%s275 + $0xa8] sm:$0xf]
        %v320 = vld [vmem:[%s275 + $0xac] sm:$0xf]
        %v321 = vld [vmem:[%s275 + $0xb0] sm:$0x1]
        %v322 = vld [vmem:[%s275 + $0xb4] sm:$0xf]
        %v323 = vld [vmem:[%s275 + $0xb8] sm:$0xf]
        %v324 = vld [vmem:[%s275 + $0xbc] sm:$0x1]
        %v325 = vld [vmem:[%s275 + $0xc0] sm:$0xf]
        %v326 = vld [vmem:[%s275 + $0xc4] sm:$0xf]
        %v327 = vld [vmem:[%s275 + $0xc8] sm:$0x1]
        %v328 = vld [vmem:[%s275 + $0xcc] sm:$0xf]
        %v329 = vld [vmem:[%s275 + $0xd0] sm:$0xf]
        %v330 = vld [vmem:[%s275 + $0xd4] sm:$0x1]
        %331 = vst [vmem:[#allocation2] sm:$0xf] 0
        %332 = vst [vmem:[#allocation2 + $0x4] sm:$0xf] 0
        %333 = vst [vmem:[#allocation2 + $0x8] sm:$0xf] 0
        %334 = vst [vmem:[#allocation2 + $0xc] sm:$0xf] 0
        %335 = vst [vmem:[#allocation2 + $0x10] sm:$0xf] 0
        %336 = vst [vmem:[#allocation2 + $0x14] sm:$0xf] 0
        %337 = vst [vmem:[#allocation2 + $0x18] sm:$0xf] 0
        %338 = vst [vmem:[#allocation2 + $0x1c] sm:$0xf] 0
        %339 = vst [vmem:[#allocation2 + $0x20] sm:$0xf] 0
        %340 = vst [vmem:[#allocation2 + $0x24] sm:$0xf] 0
        %341 = vst [vmem:[#allocation2 + $0x28] sm:$0xf] 0
        %342 = vst [vmem:[#allocation2 + $0x2c] sm:$0xf] 0
        %343 = vst [vmem:[#allocation2 + $0x30] sm:$0xf] 0
        %344 = vst [vmem:[#allocation2 + $0x34] sm:$0xf] 0
        %345 = vst [vmem:[#allocation2 + $0x38] sm:$0xf] 0
        %346 = vst [vmem:[#allocation2 + $0x3c] sm:$0xf] 0
        %347 = vst [vmem:[#allocation2 + $0x40] sm:$0xf] 0
        %348 = vst [vmem:[#allocation2 + $0x44] sm:$0xf] 0
        %349 = vst [vmem:[#allocation2 + $0x48] sm:$0xf] 0
        %350 = vst [vmem:[#allocation2 + $0x4c] sm:$0xf] 0
        %351 = vst [vmem:[#allocation2 + $0x50] sm:$0xf] 0
        %352 = vst [vmem:[#allocation2 + $0x54] sm:$0xf] 0
        %353 = vst [vmem:[#allocation2 + $0x58] sm:$0xf] 0
        %354 = vst [vmem:[#allocation2 + $0x5c] sm:$0xf] 0
        %355 = vst [vmem:[#allocation2 + $0x60] sm:$0xf] 0
        %356 = vst [vmem:[#allocation2 + $0x64] sm:$0xf] 0
        %357 = vst [vmem:[#allocation2 + $0x68] sm:$0xf] 0
        %358 = vst [vmem:[#allocation2 + $0x6c] sm:$0xf] 0
        %359 = vst [vmem:[#allocation2 + $0x70] sm:$0xf] 0
        %360 = vst [vmem:[#allocation2 + $0x74] sm:$0xf] 0
        %361 = vst [vmem:[#allocation2 + $0x78] sm:$0xf] 0
        %362 = vst [vmem:[#allocation2 + $0x7c] sm:$0xf] 0
        %vm363 = vcmask 27648
        %364 = vst.msk [vmem:[#allocation2] sm:$0xf] %vm363, %v277
        %365 = vst.msk [vmem:[#allocation2 + $0x4] sm:$0xf] %vm363, %v278
        %366 = vst.msk [vmem:[#allocation2 + $0x8] sm:$0xf] %vm363, %v280
        %367 = vst.msk [vmem:[#allocation2 + $0xc] sm:$0xf] %vm363, %v281
        %368 = vst.msk [vmem:[#allocation2 + $0x10] sm:$0xf] %vm363, %v283
        %369 = vst.msk [vmem:[#allocation2 + $0x14] sm:$0xf] %vm363, %v284
        %370 = vst.msk [vmem:[#allocation2 + $0x18] sm:$0xf] %vm363, %v286
        %371 = vst.msk [vmem:[#allocation2 + $0x1c] sm:$0xf] %vm363, %v287
        %372 = vst.msk [vmem:[#allocation2 + $0x20] sm:$0xf] %vm363, %v289
        %373 = vst.msk [vmem:[#allocation2 + $0x24] sm:$0xf] %vm363, %v290
        %374 = vst.msk [vmem:[#allocation2 + $0x28] sm:$0xf] %vm363, %v292
        %375 = vst.msk [vmem:[#allocation2 + $0x2c] sm:$0xf] %vm363, %v293
        %376 = vst.msk [vmem:[#allocation2 + $0x30] sm:$0xf] %vm363, %v295
        %377 = vst.msk [vmem:[#allocation2 + $0x34] sm:$0xf] %vm363, %v296
        %378 = vst.msk [vmem:[#allocation2 + $0x38] sm:$0xf] %vm363, %v298
        %379 = vst.msk [vmem:[#allocation2 + $0x3c] sm:$0xf] %vm363, %v299
        %380 = vst.msk [vmem:[#allocation2 + $0x40] sm:$0xf] %vm363, %v301
        %381 = vst.msk [vmem:[#allocation2 + $0x44] sm:$0xf] %vm363, %v302
        %382 = vst.msk [vmem:[#allocation2 + $0x48] sm:$0xf] %vm363, %v304
        %383 = vst.msk [vmem:[#allocation2 + $0x4c] sm:$0xf] %vm363, %v305
        %384 = vst.msk [vmem:[#allocation2 + $0x50] sm:$0xf] %vm363, %v307
        %385 = vst.msk [vmem:[#allocation2 + $0x54] sm:$0xf] %vm363, %v308
        %386 = vst.msk [vmem:[#allocation2 + $0x58] sm:$0xf] %vm363, %v310
        %387 = vst.msk [vmem:[#allocation2 + $0x5c] sm:$0xf] %vm363, %v311
        %388 = vst.msk [vmem:[#allocation2 + $0x60] sm:$0xf] %vm363, %v313
        %389 = vst.msk [vmem:[#allocation2 + $0x64] sm:$0xf] %vm363, %v314
        %390 = vst.msk [vmem:[#allocation2 + $0x68] sm:$0xf] %vm363, %v316
        %391 = vst.msk [vmem:[#allocation2 + $0x6c] sm:$0xf] %vm363, %v317
        %392 = vst.msk [vmem:[#allocation2 + $0x70] sm:$0xf] %vm363, %v319
        %393 = vst.msk [vmem:[#allocation2 + $0x74] sm:$0xf] %vm363, %v320
        %394 = vst.msk [vmem:[#allocation2 + $0x78] sm:$0xf] %vm363, %v322
        %395 = vst.msk [vmem:[#allocation2 + $0x7c] sm:$0xf] %vm363, %v323
        %vm396 = vsmask.f32 3328
        %vm397 = vsmask.f32 7440
        %vm398 = vmor %vm396, %vm397
        %v400 = vshrl.u32 %v277, 16
        %v402 = vrot.slane %v400, 4
        %v403 = vshll.u32 %v277, 16
        %v405 = vrot.slane %v403, 5
        %v406 = vor.u32 %v402, %v405
        %v407 = vrot.slane %v406, 4
        %v409 = vshll.u32 %v278, 16
        %v411 = vrot.slane %v409, 5
        %v412 = vsel %vm398, %v407, %v411
        %v413 = vshrl.u32 %v278, 16
        %v415 = vrot.slane %v413, 4
        %v416 = vor.u32 %v415, %v411
        %v417 = vrot.slane %v416, 4
        %v419 = vshll.u32 %v279, 16
        %v421 = vrot.slane %v419, 5
        %v422 = vsel %vm398, %v417, %v421
        %v424 = vshrl.u32 %v280, 16
        %v426 = vrot.slane %v424, 4
        %v427 = vshll.u32 %v280, 16
        %v429 = vrot.slane %v427, 5
        %v430 = vor.u32 %v426, %v429
        %v431 = vrot.slane %v430, 4
        %v433 = vshll.u32 %v281, 16
        %v435 = vrot.slane %v433, 5
        %v436 = vsel %vm398, %v431, %v435
        %v437 = vshrl.u32 %v281, 16
        %v439 = vrot.slane %v437, 4
        %v440 = vor.u32 %v439, %v435
        %v441 = vrot.slane %v440, 4
        %v443 = vshll.u32 %v282, 16
        %v445 = vrot.slane %v443, 5
        %v446 = vsel %vm398, %v441, %v445
        %v448 = vshrl.u32 %v283, 16
        %v450 = vrot.slane %v448, 4
        %v451 = vshll.u32 %v283, 16
        %v453 = vrot.slane %v451, 5
        %v454 = vor.u32 %v450, %v453
        %v455 = vrot.slane %v454, 4
        %v457 = vshll.u32 %v284, 16
        %v459 = vrot.slane %v457, 5
        %v460 = vsel %vm398, %v455, %v459
        %v461 = vshrl.u32 %v284, 16
        %v463 = vrot.slane %v461, 4
        %v464 = vor.u32 %v463, %v459
        %v465 = vrot.slane %v464, 4
        %v467 = vshll.u32 %v285, 16
        %v469 = vrot.slane %v467, 5
        %v470 = vsel %vm398, %v465, %v469
        %v472 = vshrl.u32 %v286, 16
        %v474 = vrot.slane %v472, 4
        %v475 = vshll.u32 %v286, 16
        %v477 = vrot.slane %v475, 5
        %v478 = vor.u32 %v474, %v477
        %v479 = vrot.slane %v478, 4
        %v481 = vshll.u32 %v287, 16
        %v483 = vrot.slane %v481, 5
        %v484 = vsel %vm398, %v479, %v483
        %v485 = vshrl.u32 %v287, 16
        %v487 = vrot.slane %v485, 4
        %v488 = vor.u32 %v487, %v483
        %v489 = vrot.slane %v488, 4
        %v491 = vshll.u32 %v288, 16
        %v493 = vrot.slane %v491, 5
        %v494 = vsel %vm398, %v489, %v493
        %v496 = vshrl.u32 %v289, 16
        %v498 = vrot.slane %v496, 4
        %v499 = vshll.u32 %v289, 16
        %v501 = vrot.slane %v499, 5
        %v502 = vor.u32 %v498, %v501
        %v503 = vrot.slane %v502, 4
        %v505 = vshll.u32 %v290, 16
        %v507 = vrot.slane %v505, 5
        %v508 = vsel %vm398, %v503, %v507
        %v509 = vshrl.u32 %v290, 16
        %v511 = vrot.slane %v509, 4
        %v512 = vor.u32 %v511, %v507
        %v513 = vrot.slane %v512, 4
        %v515 = vshll.u32 %v291, 16
        %v517 = vrot.slane %v515, 5
        %v518 = vsel %vm398, %v513, %v517
        %v520 = vshrl.u32 %v292, 16
        %v522 = vrot.slane %v520, 4
        %v523 = vshll.u32 %v292, 16
        %v525 = vrot.slane %v523, 5
        %v526 = vor.u32 %v522, %v525
        %v527 = vrot.slane %v526, 4
        %v529 = vshll.u32 %v293, 16
        %v531 = vrot.slane %v529, 5
        %v532 = vsel %vm398, %v527, %v531
        %v533 = vshrl.u32 %v293, 16
        %v535 = vrot.slane %v533, 4
        %v536 = vor.u32 %v535, %v531
        %v537 = vrot.slane %v536, 4
        %v539 = vshll.u32 %v294, 16
        %v541 = vrot.slane %v539, 5
        %v542 = vsel %vm398, %v537, %v541
        %v544 = vshrl.u32 %v295, 16
        %v546 = vrot.slane %v544, 4
        %v547 = vshll.u32 %v295, 16
        %v549 = vrot.slane %v547, 5
        %v550 = vor.u32 %v546, %v549
        %v551 = vrot.slane %v550, 4
        %v553 = vshll.u32 %v296, 16
        %v555 = vrot.slane %v553, 5
        %v556 = vsel %vm398, %v551, %v555
        %v557 = vshrl.u32 %v296, 16
        %v559 = vrot.slane %v557, 4
        %v560 = vor.u32 %v559, %v555
        %v561 = vrot.slane %v560, 4
        %v563 = vshll.u32 %v297, 16
        %v565 = vrot.slane %v563, 5
        %v566 = vsel %vm398, %v561, %v565
        %v568 = vshrl.u32 %v298, 16
        %v570 = vrot.slane %v568, 4
        %v571 = vshll.u32 %v298, 16
        %v573 = vrot.slane %v571, 5
        %v574 = vor.u32 %v570, %v573
        %v575 = vrot.slane %v574, 4
        %v577 = vshll.u32 %v299, 16
        %v579 = vrot.slane %v577, 5
        %v580 = vsel %vm398, %v575, %v579
        %v581 = vshrl.u32 %v299, 16
        %v583 = vrot.slane %v581, 4
        %v584 = vor.u32 %v583, %v579
        %v585 = vrot.slane %v584, 4
        %v587 = vshll.u32 %v300, 16
        %v589 = vrot.slane %v587, 5
        %v590 = vsel %vm398, %v585, %v589
        %v592 = vshrl.u32 %v301, 16
        %v594 = vrot.slane %v592, 4
        %v595 = vshll.u32 %v301, 16
        %v597 = vrot.slane %v595, 5
        %v598 = vor.u32 %v594, %v597
        %v599 = vrot.slane %v598, 4
        %v601 = vshll.u32 %v302, 16
        %v603 = vrot.slane %v601, 5
        %v604 = vsel %vm398, %v599, %v603
        %v605 = vshrl.u32 %v302, 16
        %v607 = vrot.slane %v605, 4
        %v608 = vor.u32 %v607, %v603
        %v609 = vrot.slane %v608, 4
        %v611 = vshll.u32 %v303, 16
        %v613 = vrot.slane %v611, 5
        %v614 = vsel %vm398, %v609, %v613
        %v616 = vshrl.u32 %v304, 16
        %v618 = vrot.slane %v616, 4
        %v619 = vshll.u32 %v304, 16
        %v621 = vrot.slane %v619, 5
        %v622 = vor.u32 %v618, %v621
        %v623 = vrot.slane %v622, 4
        %v625 = vshll.u32 %v305, 16
        %v627 = vrot.slane %v625, 5
        %v628 = vsel %vm398, %v623, %v627
        %v629 = vshrl.u32 %v305, 16
        %v631 = vrot.slane %v629, 4
        %v632 = vor.u32 %v631, %v627
        %v633 = vrot.slane %v632, 4
        %v635 = vshll.u32 %v306, 16
        %v637 = vrot.slane %v635, 5
        %v638 = vsel %vm398, %v633, %v637
        %v640 = vshrl.u32 %v307, 16
        %v642 = vrot.slane %v640, 4
        %v643 = vshll.u32 %v307, 16
        %v645 = vrot.slane %v643, 5
        %v646 = vor.u32 %v642, %v645
        %v647 = vrot.slane %v646, 4
        %v649 = vshll.u32 %v308, 16
        %v651 = vrot.slane %v649, 5
        %v652 = vsel %vm398, %v647, %v651
        %v653 = vshrl.u32 %v308, 16
        %v655 = vrot.slane %v653, 4
        %v656 = vor.u32 %v655, %v651
        %v657 = vrot.slane %v656, 4
        %v659 = vshll.u32 %v309, 16
        %v661 = vrot.slane %v659, 5
        %v662 = vsel %vm398, %v657, %v661
        %v664 = vshrl.u32 %v310, 16
        %v666 = vrot.slane %v664, 4
        %v667 = vshll.u32 %v310, 16
        %v669 = vrot.slane %v667, 5
        %v670 = vor.u32 %v666, %v669
        %v671 = vrot.slane %v670, 4
        %v673 = vshll.u32 %v311, 16
        %v675 = vrot.slane %v673, 5
        %v676 = vsel %vm398, %v671, %v675
        %v677 = vshrl.u32 %v311, 16
        %v679 = vrot.slane %v677, 4
        %v680 = vor.u32 %v679, %v675
        %v681 = vrot.slane %v680, 4
        %v683 = vshll.u32 %v312, 16
        %v685 = vrot.slane %v683, 5
        %v686 = vsel %vm398, %v681, %v685
        %v688 = vshrl.u32 %v313, 16
        %v690 = vrot.slane %v688, 4
        %v691 = vshll.u32 %v313, 16
        %v693 = vrot.slane %v691, 5
        %v694 = vor.u32 %v690, %v693
        %v695 = vrot.slane %v694, 4
        %v697 = vshll.u32 %v314, 16
        %v699 = vrot.slane %v697, 5
        %v700 = vsel %vm398, %v695, %v699
        %v701 = vshrl.u32 %v314, 16
        %v703 = vrot.slane %v701, 4
        %v704 = vor.u32 %v703, %v699
        %v705 = vrot.slane %v704, 4
        %v707 = vshll.u32 %v315, 16
        %v709 = vrot.slane %v707, 5
        %v710 = vsel %vm398, %v705, %v709
        %v712 = vshrl.u32 %v316, 16
        %v714 = vrot.slane %v712, 4
        %v715 = vshll.u32 %v316, 16
        %v717 = vrot.slane %v715, 5
        %v718 = vor.u32 %v714, %v717
        %v719 = vrot.slane %v718, 4
        %v721 = vshll.u32 %v317, 16
        %v723 = vrot.slane %v721, 5
        %v724 = vsel %vm398, %v719, %v723
        %v725 = vshrl.u32 %v317, 16
        %v727 = vrot.slane %v725, 4
        %v728 = vor.u32 %v727, %v723
        %v729 = vrot.slane %v728, 4
        %v731 = vshll.u32 %v318, 16
        %v733 = vrot.slane %v731, 5
        %v734 = vsel %vm398, %v729, %v733
        %v736 = vshrl.u32 %v319, 16
        %v738 = vrot.slane %v736, 4
        %v739 = vshll.u32 %v319, 16
        %v741 = vrot.slane %v739, 5
        %v742 = vor.u32 %v738, %v741
        %v743 = vrot.slane %v742, 4
        %v745 = vshll.u32 %v320, 16
        %v747 = vrot.slane %v745, 5
        %v748 = vsel %vm398, %v743, %v747
        %v749 = vshrl.u32 %v320, 16
        %v751 = vrot.slane %v749, 4
        %v752 = vor.u32 %v751, %v747
        %v753 = vrot.slane %v752, 4
        %v755 = vshll.u32 %v321, 16
        %v757 = vrot.slane %v755, 5
        %v758 = vsel %vm398, %v753, %v757
        %v760 = vshrl.u32 %v322, 16
        %v762 = vrot.slane %v760, 4
        %v763 = vshll.u32 %v322, 16
        %v765 = vrot.slane %v763, 5
        %v766 = vor.u32 %v762, %v765
        %v767 = vrot.slane %v766, 4
        %v769 = vshll.u32 %v323, 16
        %v771 = vrot.slane %v769, 5
        %v772 = vsel %vm398, %v767, %v771
        %v773 = vshrl.u32 %v323, 16
        %v775 = vrot.slane %v773, 4
        %v776 = vor.u32 %v775, %v771
        %v777 = vrot.slane %v776, 4
        %v779 = vshll.u32 %v324, 16
        %v781 = vrot.slane %v779, 5
        %v782 = vsel %vm398, %v777, %v781
        %783 = vrot.lane.b32.xlu0 %v412, 4
        %v784 = vpop.permute.xlu0 %783
        %785 = vrot.lane.b32.xlu0 %v422, 4
        %v786 = vpop.permute.xlu0 %785
        %787 = vrot.lane.b32.xlu0 %v436, 4
        %v788 = vpop.permute.xlu0 %787
        %789 = vrot.lane.b32.xlu0 %v446, 4
        %v790 = vpop.permute.xlu0 %789
        %791 = vrot.lane.b32.xlu0 %v460, 4
        %v792 = vpop.permute.xlu0 %791
        %793 = vrot.lane.b32.xlu0 %v470, 4
        %v794 = vpop.permute.xlu0 %793
        %795 = vrot.lane.b32.xlu0 %v484, 4
        %v796 = vpop.permute.xlu0 %795
        %797 = vrot.lane.b32.xlu0 %v494, 4
        %v798 = vpop.permute.xlu0 %797
        %799 = vrot.lane.b32.xlu0 %v508, 4
        %v800 = vpop.permute.xlu0 %799
        %801 = vrot.lane.b32.xlu0 %v518, 4
        %v802 = vpop.permute.xlu0 %801
        %803 = vrot.lane.b32.xlu0 %v532, 4
        %v804 = vpop.permute.xlu0 %803
        %805 = vrot.lane.b32.xlu0 %v542, 4
        %v806 = vpop.permute.xlu0 %805
        %807 = vrot.lane.b32.xlu0 %v556, 4
        %v808 = vpop.permute.xlu0 %807
        %809 = vrot.lane.b32.xlu0 %v566, 4
        %v810 = vpop.permute.xlu0 %809
        %811 = vrot.lane.b32.xlu0 %v580, 4
        %v812 = vpop.permute.xlu0 %811
        %813 = vrot.lane.b32.xlu0 %v590, 4
        %v814 = vpop.permute.xlu0 %813
        %815 = vrot.lane.b32.xlu0 %v604, 4
        %v816 = vpop.permute.xlu0 %815
        %817 = vrot.lane.b32.xlu0 %v614, 4
        %v818 = vpop.permute.xlu0 %817
        %819 = vrot.lane.b32.xlu0 %v628, 4
        %v820 = vpop.permute.xlu0 %819
        %821 = vrot.lane.b32.xlu0 %v638, 4
        %v822 = vpop.permute.xlu0 %821
        %823 = vrot.lane.b32.xlu0 %v652, 4
        %v824 = vpop.permute.xlu0 %823
        %825 = vrot.lane.b32.xlu0 %v662, 4
        %v826 = vpop.permute.xlu0 %825
        %827 = vrot.lane.b32.xlu0 %v676, 4
        %v828 = vpop.permute.xlu0 %827
        %829 = vrot.lane.b32.xlu0 %v686, 4
        %v830 = vpop.permute.xlu0 %829
        %831 = vrot.lane.b32.xlu0 %v700, 4
        %v832 = vpop.permute.xlu0 %831
        %833 = vrot.lane.b32.xlu0 %v710, 4
        %v834 = vpop.permute.xlu0 %833
        %835 = vrot.lane.b32.xlu0 %v724, 4
        %v836 = vpop.permute.xlu0 %835
        %837 = vrot.lane.b32.xlu0 %v734, 4
        %v838 = vpop.permute.xlu0 %837
        %839 = vrot.lane.b32.xlu0 %v748, 4
        %v840 = vpop.permute.xlu0 %839
        %841 = vrot.lane.b32.xlu0 %v758, 4
        %v842 = vpop.permute.xlu0 %841
        %843 = vrot.lane.b32.xlu0 %v772, 4
        %v844 = vpop.permute.xlu0 %843
        %845 = vrot.lane.b32.xlu0 %v782, 4
        %v846 = vpop.permute.xlu0 %845
        %vm879 = vcmask 60448
        %880 = vst.msk [vmem:[#allocation2] sm:$0xf] %vm879, %v784
        %881 = vst.msk [vmem:[#allocation2 + $0x4] sm:$0xf] %vm879, %v786
        %882 = vst.msk [vmem:[#allocation2 + $0x8] sm:$0xf] %vm879, %v788
        %883 = vst.msk [vmem:[#allocation2 + $0xc] sm:$0xf] %vm879, %v790
        %884 = vst.msk [vmem:[#allocation2 + $0x10] sm:$0xf] %vm879, %v792
        %885 = vst.msk [vmem:[#allocation2 + $0x14] sm:$0xf] %vm879, %v794
        %886 = vst.msk [vmem:[#allocation2 + $0x18] sm:$0xf] %vm879, %v796
        %887 = vst.msk [vmem:[#allocation2 + $0x1c] sm:$0xf] %vm879, %v798
        %888 = vst.msk [vmem:[#allocation2 + $0x20] sm:$0xf] %vm879, %v800
        %889 = vst.msk [vmem:[#allocation2 + $0x24] sm:$0xf] %vm879, %v802
        %890 = vst.msk [vmem:[#allocation2 + $0x28] sm:$0xf] %vm879, %v804
        %891 = vst.msk [vmem:[#allocation2 + $0x2c] sm:$0xf] %vm879, %v806
        %892 = vst.msk [vmem:[#allocation2 + $0x30] sm:$0xf] %vm879, %v808
        %893 = vst.msk [vmem:[#allocation2 + $0x34] sm:$0xf] %vm879, %v810
        %894 = vst.msk [vmem:[#allocation2 + $0x38] sm:$0xf] %vm879, %v812
        %895 = vst.msk [vmem:[#allocation2 + $0x3c] sm:$0xf] %vm879, %v814
        %896 = vst.msk [vmem:[#allocation2 + $0x40] sm:$0xf] %vm879, %v816
        %897 = vst.msk [vmem:[#allocation2 + $0x44] sm:$0xf] %vm879, %v818
        %898 = vst.msk [vmem:[#allocation2 + $0x48] sm:$0xf] %vm879, %v820
        %899 = vst.msk [vmem:[#allocation2 + $0x4c] sm:$0xf] %vm879, %v822
        %900 = vst.msk [vmem:[#allocation2 + $0x50] sm:$0xf] %vm879, %v824
        %901 = vst.msk [vmem:[#allocation2 + $0x54] sm:$0xf] %vm879, %v826
        %902 = vst.msk [vmem:[#allocation2 + $0x58] sm:$0xf] %vm879, %v828
        %903 = vst.msk [vmem:[#allocation2 + $0x5c] sm:$0xf] %vm879, %v830
        %904 = vst.msk [vmem:[#allocation2 + $0x60] sm:$0xf] %vm879, %v832
        %905 = vst.msk [vmem:[#allocation2 + $0x64] sm:$0xf] %vm879, %v834
        %906 = vst.msk [vmem:[#allocation2 + $0x68] sm:$0xf] %vm879, %v836
        %907 = vst.msk [vmem:[#allocation2 + $0x6c] sm:$0xf] %vm879, %v838
        %908 = vst.msk [vmem:[#allocation2 + $0x70] sm:$0xf] %vm879, %v840
        %909 = vst.msk [vmem:[#allocation2 + $0x74] sm:$0xf] %vm879, %v842
        %910 = vst.msk [vmem:[#allocation2 + $0x78] sm:$0xf] %vm879, %v844
        %911 = vst.msk [vmem:[#allocation2 + $0x7c] sm:$0xf] %vm879, %v846
        %vm960 = vcmask 1042432
        %vm961 = vcmask 1046532
        %vm962 = vmor %vm960, %vm961
        %v963 = vrot.slane %v277, 5
        %v964 = vrot.slane %v963, 4
        %v965 = vrot.slane %v278, 5
        %v966 = vsel %vm962, %v964, %v965
        %v967 = vrot.slane %v965, 4
        %v968 = vrot.slane %v279, 5
        %v969 = vsel %vm962, %v967, %v968
        %v970 = vrot.slane %v280, 5
        %v971 = vrot.slane %v970, 4
        %v972 = vrot.slane %v281, 5
        %v973 = vsel %vm962, %v971, %v972
        %v974 = vrot.slane %v972, 4
        %v975 = vrot.slane %v282, 5
        %v976 = vsel %vm962, %v974, %v975
        %v977 = vrot.slane %v283, 5
        %v978 = vrot.slane %v977, 4
        %v979 = vrot.slane %v284, 5
        %v980 = vsel %vm962, %v978, %v979
        %v981 = vrot.slane %v979, 4
        %v982 = vrot.slane %v285, 5
        %v983 = vsel %vm962, %v981, %v982
        %v984 = vrot.slane %v286, 5
        %v985 = vrot.slane %v984, 4
        %v986 = vrot.slane %v287, 5
        %v987 = vsel %vm962, %v985, %v986
        %v988 = vrot.slane %v986, 4
        %v989 = vrot.slane %v288, 5
        %v990 = vsel %vm962, %v988, %v989
        %v991 = vrot.slane %v289, 5
        %v992 = vrot.slane %v991, 4
        %v993 = vrot.slane %v290, 5
        %v994 = vsel %vm962, %v992, %v993
        %v995 = vrot.slane %v993, 4
        %v996 = vrot.slane %v291, 5
        %v997 = vsel %vm962, %v995, %v996
        %v998 = vrot.slane %v292, 5
        %v999 = vrot.slane %v998, 4
        %v1000 = vrot.slane %v293, 5
        %v1001 = vsel %vm962, %v999, %v1000
        %v1002 = vrot.slane %v1000, 4
        %v1003 = vrot.slane %v294, 5
        %v1004 = vsel %vm962, %v1002, %v1003
        %v1005 = vrot.slane %v295, 5
        %v1006 = vrot.slane %v1005, 4
        %v1007 = vrot.slane %v296, 5
        %v1008 = vsel %vm962, %v1006, %v1007
        %v1009 = vrot.slane %v1007, 4
        %v1010 = vrot.slane %v297, 5
        %v1011 = vsel %vm962, %v1009, %v1010
        %v1012 = vrot.slane %v298, 5
        %v1013 = vrot.slane %v1012, 4
        %v1014 = vrot.slane %v299, 5
        %v1015 = vsel %vm962, %v1013, %v1014
        %v1016 = vrot.slane %v1014, 4
        %v1017 = vrot.slane %v300, 5
        %v1018 = vsel %vm962, %v1016, %v1017
        %v1019 = vrot.slane %v301, 5
        %v1020 = vrot.slane %v1019, 4
        %v1021 = vrot.slane %v302, 5
        %v1022 = vsel %vm962, %v1020, %v1021
        %v1023 = vrot.slane %v1021, 4
        %v1024 = vrot.slane %v303, 5
        %v1025 = vsel %vm962, %v1023, %v1024
        %v1026 = vrot.slane %v304, 5
        %v1027 = vrot.slane %v1026, 4
        %v1028 = vrot.slane %v305, 5
        %v1029 = vsel %vm962, %v1027, %v1028
        %v1030 = vrot.slane %v1028, 4
        %v1031 = vrot.slane %v306, 5
        %v1032 = vsel %vm962, %v1030, %v1031
        %v1033 = vrot.slane %v307, 5
        %v1034 = vrot.slane %v1033, 4
        %v1035 = vrot.slane %v308, 5
        %v1036 = vsel %vm962, %v1034, %v1035
        %v1037 = vrot.slane %v1035, 4
        %v1038 = vrot.slane %v309, 5
        %v1039 = vsel %vm962, %v1037, %v1038
        %v1040 = vrot.slane %v310, 5
        %v1041 = vrot.slane %v1040, 4
        %v1042 = vrot.slane %v311, 5
        %v1043 = vsel %vm962, %v1041, %v1042
        %v1044 = vrot.slane %v1042, 4
        %v1045 = vrot.slane %v312, 5
        %v1046 = vsel %vm962, %v1044, %v1045
        %v1047 = vrot.slane %v313, 5
        %v1048 = vrot.slane %v1047, 4
        %v1049 = vrot.slane %v314, 5
        %v1050 = vsel %vm962, %v1048, %v1049
        %v1051 = vrot.slane %v1049, 4
        %v1052 = vrot.slane %v315, 5
        %v1053 = vsel %vm962, %v1051, %v1052
        %v1054 = vrot.slane %v316, 5
        %v1055 = vrot.slane %v1054, 4
        %v1056 = vrot.slane %v317, 5
        %v1057 = vsel %vm962, %v1055, %v1056
        %v1058 = vrot.slane %v1056, 4
        %v1059 = vrot.slane %v318, 5
        %v1060 = vsel %vm962, %v1058, %v1059
        %v1061 = vrot.slane %v319, 5
        %v1062 = vrot.slane %v1061, 4
        %v1063 = vrot.slane %v320, 5
        %v1064 = vsel %vm962, %v1062, %v1063
        %v1065 = vrot.slane %v1063, 4
        %v1066 = vrot.slane %v321, 5
        %v1067 = vsel %vm962, %v1065, %v1066
        %v1068 = vrot.slane %v322, 5
        %v1069 = vrot.slane %v1068, 4
        %v1070 = vrot.slane %v323, 5
        %v1071 = vsel %vm962, %v1069, %v1070
        %v1072 = vrot.slane %v1070, 4
        %v1073 = vrot.slane %v324, 5
        %v1074 = vsel %vm962, %v1072, %v1073
        %1075 = vrot.lane.b32.xlu0 %v966, 8
        %v1076 = vpop.permute.xlu0 %1075
        %1077 = vrot.lane.b32.xlu0 %v969, 8
        %v1078 = vpop.permute.xlu0 %1077
        %1079 = vrot.lane.b32.xlu0 %v973, 8
        %v1080 = vpop.permute.xlu0 %1079
        %1081 = vrot.lane.b32.xlu0 %v976, 8
        %v1082 = vpop.permute.xlu0 %1081
        %1083 = vrot.lane.b32.xlu0 %v980, 8
        %v1084 = vpop.permute.xlu0 %1083
        %1085 = vrot.lane.b32.xlu0 %v983, 8
        %v1086 = vpop.permute.xlu0 %1085
        %1087 = vrot.lane.b32.xlu0 %v987, 8
        %v1088 = vpop.permute.xlu0 %1087
        %1089 = vrot.lane.b32.xlu0 %v990, 8
        %v1090 = vpop.permute.xlu0 %1089
        %1091 = vrot.lane.b32.xlu0 %v994, 8
        %v1092 = vpop.permute.xlu0 %1091
        %1093 = vrot.lane.b32.xlu0 %v997, 8
        %v1094 = vpop.permute.xlu0 %1093
        %1095 = vrot.lane.b32.xlu0 %v1001, 8
        %v1096 = vpop.permute.xlu0 %1095
        %1097 = vrot.lane.b32.xlu0 %v1004, 8
        %v1098 = vpop.permute.xlu0 %1097
        %1099 = vrot.lane.b32.xlu0 %v1008, 8
        %v1100 = vpop.permute.xlu0 %1099
        %1101 = vrot.lane.b32.xlu0 %v1011, 8
        %v1102 = vpop.permute.xlu0 %1101
        %1103 = vrot.lane.b32.xlu0 %v1015, 8
        %v1104 = vpop.permute.xlu0 %1103
        %1105 = vrot.lane.b32.xlu0 %v1018, 8
        %v1106 = vpop.permute.xlu0 %1105
        %1107 = vrot.lane.b32.xlu0 %v1022, 8
        %v1108 = vpop.permute.xlu0 %1107
        %1109 = vrot.lane.b32.xlu0 %v1025, 8
        %v1110 = vpop.permute.xlu0 %1109
        %1111 = vrot.lane.b32.xlu0 %v1029, 8
        %v1112 = vpop.permute.xlu0 %1111
        %1113 = vrot.lane.b32.xlu0 %v1032, 8
        %v1114 = vpop.permute.xlu0 %1113
        %1115 = vrot.lane.b32.xlu0 %v1036, 8
        %v1116 = vpop.permute.xlu0 %1115
        %1117 = vrot.lane.b32.xlu0 %v1039, 8
        %v1118 = vpop.permute.xlu0 %1117
        %1119 = vrot.lane.b32.xlu0 %v1043, 8
        %v1120 = vpop.permute.xlu0 %1119
        %1121 = vrot.lane.b32.xlu0 %v1046, 8
        %v1122 = vpop.permute.xlu0 %1121
        %1123 = vrot.lane.b32.xlu0 %v1050, 8
        %v1124 = vpop.permute.xlu0 %1123
        %1125 = vrot.lane.b32.xlu0 %v1053, 8
        %v1126 = vpop.permute.xlu0 %1125
        %1127 = vrot.lane.b32.xlu0 %v1057, 8
        %v1128 = vpop.permute.xlu0 %1127
        %1129 = vrot.lane.b32.xlu0 %v1060, 8
        %v1130 = vpop.permute.xlu0 %1129
        %1131 = vrot.lane.b32.xlu0 %v1064, 8
        %v1132 = vpop.permute.xlu0 %1131
        %1133 = vrot.lane.b32.xlu0 %v1067, 8
        %v1134 = vpop.permute.xlu0 %1133
        %1135 = vrot.lane.b32.xlu0 %v1071, 8
        %v1136 = vpop.permute.xlu0 %1135
        %1137 = vrot.lane.b32.xlu0 %v1074, 8
        %v1138 = vpop.permute.xlu0 %1137
        %vm1171 = vcmask 93248
        %1172 = vst.msk [vmem:[#allocation2] sm:$0xf] %vm1171, %v1076
        %1173 = vst.msk [vmem:[#allocation2 + $0x4] sm:$0xf] %vm1171, %v1078
        %1174 = vst.msk [vmem:[#allocation2 + $0x8] sm:$0xf] %vm1171, %v1080
        %1175 = vst.msk [vmem:[#allocation2 + $0xc] sm:$0xf] %vm1171, %v1082
        %1176 = vst.msk [vmem:[#allocation2 + $0x10] sm:$0xf] %vm1171, %v1084
        %1177 = vst.msk [vmem:[#allocation2 + $0x14] sm:$0xf] %vm1171, %v1086
        %1178 = vst.msk [vmem:[#allocation2 + $0x18] sm:$0xf] %vm1171, %v1088
        %1179 = vst.msk [vmem:[#allocation2 + $0x1c] sm:$0xf] %vm1171, %v1090
        %1180 = vst.msk [vmem:[#allocation2 + $0x20] sm:$0xf] %vm1171, %v1092
        %1181 = vst.msk [vmem:[#allocation2 + $0x24] sm:$0xf] %vm1171, %v1094
        %1182 = vst.msk [vmem:[#allocation2 + $0x28] sm:$0xf] %vm1171, %v1096
        %1183 = vst.msk [vmem:[#allocation2 + $0x2c] sm:$0xf] %vm1171, %v1098
        %1184 = vst.msk [vmem:[#allocation2 + $0x30] sm:$0xf] %vm1171, %v1100
        %1185 = vst.msk [vmem:[#allocation2 + $0x34] sm:$0xf] %vm1171, %v1102
        %1186 = vst.msk [vmem:[#allocation2 + $0x38] sm:$0xf] %vm1171, %v1104
        %1187 = vst.msk [vmem:[#allocation2 + $0x3c] sm:$0xf] %vm1171, %v1106
        %1188 = vst.msk [vmem:[#allocation2 + $0x40] sm:$0xf] %vm1171, %v1108
        %1189 = vst.msk [vmem:[#allocation2 + $0x44] sm:$0xf] %vm1171, %v1110
        %1190 = vst.msk [vmem:[#allocation2 + $0x48] sm:$0xf] %vm1171, %v1112
        %1191 = vst.msk [vmem:[#allocation2 + $0x4c] sm:$0xf] %vm1171, %v1114
        %1192 = vst.msk [vmem:[#allocation2 + $0x50] sm:$0xf] %vm1171, %v1116
        %1193 = vst.msk [vmem:[#allocation2 + $0x54] sm:$0xf] %vm1171, %v1118
        %1194 = vst.msk [vmem:[#allocation2 + $0x58] sm:$0xf] %vm1171, %v1120
        %1195 = vst.msk [vmem:[#allocation2 + $0x5c] sm:$0xf] %vm1171, %v1122
        %1196 = vst.msk [vmem:[#allocation2 + $0x60] sm:$0xf] %vm1171, %v1124
        %1197 = vst.msk [vmem:[#allocation2 + $0x64] sm:$0xf] %vm1171, %v1126
        %1198 = vst.msk [vmem:[#allocation2 + $0x68] sm:$0xf] %vm1171, %v1128
        %1199 = vst.msk [vmem:[#allocation2 + $0x6c] sm:$0xf] %vm1171, %v1130
        %1200 = vst.msk [vmem:[#allocation2 + $0x70] sm:$0xf] %vm1171, %v1132
        %1201 = vst.msk [vmem:[#allocation2 + $0x74] sm:$0xf] %vm1171, %v1134
        %1202 = vst.msk [vmem:[#allocation2 + $0x78] sm:$0xf] %vm1171, %v1136
        %1203 = vst.msk [vmem:[#allocation2 + $0x7c] sm:$0xf] %vm1171, %v1138
        %1206 = vrot.lane.b32.xlu0 %v280, 12
        %v1207 = vpop.permute.xlu0 %1206
        %1208 = vrot.lane.b32.xlu0 %v281, 12
        %v1209 = vpop.permute.xlu0 %1208
        %1210 = vrot.lane.b32.xlu0 %v283, 12
        %v1211 = vpop.permute.xlu0 %1210
        %1212 = vrot.lane.b32.xlu0 %v284, 12
        %v1213 = vpop.permute.xlu0 %1212
        %1214 = vrot.lane.b32.xlu0 %v286, 12
        %v1215 = vpop.permute.xlu0 %1214
        %1216 = vrot.lane.b32.xlu0 %v287, 12
        %v1217 = vpop.permute.xlu0 %1216
        %1218 = vrot.lane.b32.xlu0 %v289, 12
        %v1219 = vpop.permute.xlu0 %1218
        %1220 = vrot.lane.b32.xlu0 %v290, 12
        %v1221 = vpop.permute.xlu0 %1220
        %1222 = vrot.lane.b32.xlu0 %v292, 12
        %v1223 = vpop.permute.xlu0 %1222
        %1224 = vrot.lane.b32.xlu0 %v293, 12
        %v1225 = vpop.permute.xlu0 %1224
        %1226 = vrot.lane.b32.xlu0 %v295, 12
        %v1227 = vpop.permute.xlu0 %1226
        %1228 = vrot.lane.b32.xlu0 %v296, 12
        %v1229 = vpop.permute.xlu0 %1228
        %1230 = vrot.lane.b32.xlu0 %v298, 12
        %v1231 = vpop.permute.xlu0 %1230
        %1232 = vrot.lane.b32.xlu0 %v299, 12
        %v1233 = vpop.permute.xlu0 %1232
        %1234 = vrot.lane.b32.xlu0 %v301, 12
        %v1235 = vpop.permute.xlu0 %1234
        %1236 = vrot.lane.b32.xlu0 %v302, 12
        %v1237 = vpop.permute.xlu0 %1236
        %1238 = vrot.lane.b32.xlu0 %v304, 12
        %v1239 = vpop.permute.xlu0 %1238
        %1240 = vrot.lane.b32.xlu0 %v305, 12
        %v1241 = vpop.permute.xlu0 %1240
        %1242 = vrot.lane.b32.xlu0 %v307, 12
        %v1243 = vpop.permute.xlu0 %1242
        %1244 = vrot.lane.b32.xlu0 %v308, 12
        %v1245 = vpop.permute.xlu0 %1244
        %1246 = vrot.lane.b32.xlu0 %v310, 12
        %v1247 = vpop.permute.xlu0 %1246
        %1248 = vrot.lane.b32.xlu0 %v311, 12
        %v1249 = vpop.permute.xlu0 %1248
        %1250 = vrot.lane.b32.xlu0 %v313, 12
        %v1251 = vpop.permute.xlu0 %1250
        %1252 = vrot.lane.b32.xlu0 %v314, 12
        %v1253 = vpop.permute.xlu0 %1252
        %1254 = vrot.lane.b32.xlu0 %v316, 12
        %v1255 = vpop.permute.xlu0 %1254
        %1256 = vrot.lane.b32.xlu0 %v317, 12
        %v1257 = vpop.permute.xlu0 %1256
        %1258 = vrot.lane.b32.xlu0 %v319, 12
        %v1259 = vpop.permute.xlu0 %1258
        %1260 = vrot.lane.b32.xlu0 %v320, 12
        %v1261 = vpop.permute.xlu0 %1260
        %1262 = vrot.lane.b32.xlu0 %v322, 12
        %v1263 = vpop.permute.xlu0 %1262
        %1264 = vrot.lane.b32.xlu0 %v323, 12
        %v1265 = vpop.permute.xlu0 %1264
        %1266 = vrot.lane.b32.xlu0 %v325, 12
        %v1267 = vpop.permute.xlu0 %1266
        %1268 = vrot.lane.b32.xlu0 %v326, 12
        %v1269 = vpop.permute.xlu0 %1268
        %vm1302 = vcmask 126048
        %1303 = vst.msk [vmem:[#allocation2] sm:$0xf] %vm1302, %v1207
        %1304 = vst.msk [vmem:[#allocation2 + $0x4] sm:$0xf] %vm1302, %v1209
        %1305 = vst.msk [vmem:[#allocation2 + $0x8] sm:$0xf] %vm1302, %v1211
        %1306 = vst.msk [vmem:[#allocation2 + $0xc] sm:$0xf] %vm1302, %v1213
        %1307 = vst.msk [vmem:[#allocation2 + $0x10] sm:$0xf] %vm1302, %v1215
        %1308 = vst.msk [vmem:[#allocation2 + $0x14] sm:$0xf] %vm1302, %v1217
        %1309 = vst.msk [vmem:[#allocation2 + $0x18] sm:$0xf] %vm1302, %v1219
        %1310 = vst.msk [vmem:[#allocation2 + $0x1c] sm:$0xf] %vm1302, %v1221
        %1311 = vst.msk [vmem:[#allocation2 + $0x20] sm:$0xf] %vm1302, %v1223
        %1312 = vst.msk [vmem:[#allocation2 + $0x24] sm:$0xf] %vm1302, %v1225
        %1313 = vst.msk [vmem:[#allocation2 + $0x28] sm:$0xf] %vm1302, %v1227
        %1314 = vst.msk [vmem:[#allocation2 + $0x2c] sm:$0xf] %vm1302, %v1229
        %1315 = vst.msk [vmem:[#allocation2 + $0x30] sm:$0xf] %vm1302, %v1231
        %1316 = vst.msk [vmem:[#allocation2 + $0x34] sm:$0xf] %vm1302, %v1233
        %1317 = vst.msk [vmem:[#allocation2 + $0x38] sm:$0xf] %vm1302, %v1235
        %1318 = vst.msk [vmem:[#allocation2 + $0x3c] sm:$0xf] %vm1302, %v1237
        %1319 = vst.msk [vmem:[#allocation2 + $0x40] sm:$0xf] %vm1302, %v1239
        %1320 = vst.msk [vmem:[#allocation2 + $0x44] sm:$0xf] %vm1302, %v1241
        %1321 = vst.msk [vmem:[#allocation2 + $0x48] sm:$0xf] %vm1302, %v1243
        %1322 = vst.msk [vmem:[#allocation2 + $0x4c] sm:$0xf] %vm1302, %v1245
        %1323 = vst.msk [vmem:[#allocation2 + $0x50] sm:$0xf] %vm1302, %v1247
        %1324 = vst.msk [vmem:[#allocation2 + $0x54] sm:$0xf] %vm1302, %v1249
        %1325 = vst.msk [vmem:[#allocation2 + $0x58] sm:$0xf] %vm1302, %v1251
        %1326 = vst.msk [vmem:[#allocation2 + $0x5c] sm:$0xf] %vm1302, %v1253
        %1327 = vst.msk [vmem:[#allocation2 + $0x60] sm:$0xf] %vm1302, %v1255
        %1328 = vst.msk [vmem:[#allocation2 + $0x64] sm:$0xf] %vm1302, %v1257
        %1329 = vst.msk [vmem:[#allocation2 + $0x68] sm:$0xf] %vm1302, %v1259
        %1330 = vst.msk [vmem:[#allocation2 + $0x6c] sm:$0xf] %vm1302, %v1261
        %1331 = vst.msk [vmem:[#allocation2 + $0x70] sm:$0xf] %vm1302, %v1263
        %1332 = vst.msk [vmem:[#allocation2 + $0x74] sm:$0xf] %vm1302, %v1265
        %1333 = vst.msk [vmem:[#allocation2 + $0x78] sm:$0xf] %vm1302, %v1267
        %1334 = vst.msk [vmem:[#allocation2 + $0x7c] sm:$0xf] %vm1302, %v1269
        %v1336 = vshrl.u32 %v325, 16
        %v1338 = vrot.slane %v1336, 4
        %v1339 = vshll.u32 %v325, 16
        %v1341 = vrot.slane %v1339, 5
        %v1342 = vor.u32 %v1338, %v1341
        %v1343 = vrot.slane %v1342, 4
        %v1345 = vshll.u32 %v326, 16
        %v1347 = vrot.slane %v1345, 5
        %v1348 = vsel %vm398, %v1343, %v1347
        %v1349 = vshrl.u32 %v326, 16
        %v1351 = vrot.slane %v1349, 4
        %v1352 = vor.u32 %v1351, %v1347
        %v1353 = vrot.slane %v1352, 4
        %v1355 = vshll.u32 %v327, 16
        %v1357 = vrot.slane %v1355, 5
        %v1358 = vsel %vm398, %v1353, %v1357
        %1359 = vrot.lane.b32.xlu0 %v436, 16
        %v1360 = vpop.permute.xlu0 %1359
        %1361 = vrot.lane.b32.xlu0 %v446, 16
        %v1362 = vpop.permute.xlu0 %1361
        %1363 = vrot.lane.b32.xlu0 %v460, 16
        %v1364 = vpop.permute.xlu0 %1363
        %1365 = vrot.lane.b32.xlu0 %v470, 16
        %v1366 = vpop.permute.xlu0 %1365
        %1367 = vrot.lane.b32.xlu0 %v484, 16
        %v1368 = vpop.permute.xlu0 %1367
        %1369 = vrot.lane.b32.xlu0 %v494, 16
        %v1370 = vpop.permute.xlu0 %1369
        %1371 = vrot.lane.b32.xlu0 %v508, 16
        %v1372 = vpop.permute.xlu0 %1371
        %1373 = vrot.lane.b32.xlu0 %v518, 16
        %v1374 = vpop.permute.xlu0 %1373
        %1375 = vrot.lane.b32.xlu0 %v532, 16
        %v1376 = vpop.permute.xlu0 %1375
        %1377 = vrot.lane.b32.xlu0 %v542, 16
        %v1378 = vpop.permute.xlu0 %1377
        %1379 = vrot.lane.b32.xlu0 %v556, 16
        %v1380 = vpop.permute.xlu0 %1379
        %1381 = vrot.lane.b32.xlu0 %v566, 16
        %v1382 = vpop.permute.xlu0 %1381
        %1383 = vrot.lane.b32.xlu0 %v580, 16
        %v1384 = vpop.permute.xlu0 %1383
        %1385 = vrot.lane.b32.xlu0 %v590, 16
        %v1386 = vpop.permute.xlu0 %1385
        %1387 = vrot.lane.b32.xlu0 %v604, 16
        %v1388 = vpop.permute.xlu0 %1387
        %1389 = vrot.lane.b32.xlu0 %v614, 16
        %v1390 = vpop.permute.xlu0 %1389
        %1391 = vrot.lane.b32.xlu0 %v628, 16
        %v1392 = vpop.permute.xlu0 %1391
        %1393 = vrot.lane.b32.xlu0 %v638, 16
        %v1394 = vpop.permute.xlu0 %1393
        %1395 = vrot.lane.b32.xlu0 %v652, 16
        %v1396 = vpop.permute.xlu0 %1395
        %1397 = vrot.lane.b32.xlu0 %v662, 16
        %v1398 = vpop.permute.xlu0 %1397
        %1399 = vrot.lane.b32.xlu0 %v676, 16
        %v1400 = vpop.permute.xlu0 %1399
        %1401 = vrot.lane.b32.xlu0 %v686, 16
        %v1402 = vpop.permute.xlu0 %1401
        %1403 = vrot.lane.b32.xlu0 %v700, 16
        %v1404 = vpop.permute.xlu0 %1403
        %1405 = vrot.lane.b32.xlu0 %v710, 16
        %v1406 = vpop.permute.xlu0 %1405
        %1407 = vrot.lane.b32.xlu0 %v724, 16
        %v1408 = vpop.permute.xlu0 %1407
        %1409 = vrot.lane.b32.xlu0 %v734, 16
        %v1410 = vpop.permute.xlu0 %1409
        %1411 = vrot.lane.b32.xlu0 %v748, 16
        %v1412 = vpop.permute.xlu0 %1411
        %1413 = vrot.lane.b32.xlu0 %v758, 16
        %v1414 = vpop.permute.xlu0 %1413
        %1415 = vrot.lane.b32.xlu0 %v772, 16
        %v1416 = vpop.permute.xlu0 %1415
        %1417 = vrot.lane.b32.xlu0 %v782, 16
        %v1418 = vpop.permute.xlu0 %1417
        %1419 = vrot.lane.b32.xlu0 %v1348, 16
        %v1420 = vpop.permute.xlu0 %1419
        %1421 = vrot.lane.b32.xlu0 %v1358, 16
        %v1422 = vpop.permute.xlu0 %1421
        %vm1455 = vcmask 158848
        %1456 = vst.msk [vmem:[#allocation2] sm:$0xf] %vm1455, %v1360
        %1457 = vst.msk [vmem:[#allocation2 + $0x4] sm:$0xf] %vm1455, %v1362
        %1458 = vst.msk [vmem:[#allocation2 + $0x8] sm:$0xf] %vm1455, %v1364
        %1459 = vst.msk [vmem:[#allocation2 + $0xc] sm:$0xf] %vm1455, %v1366
        %1460 = vst.msk [vmem:[#allocation2 + $0x10] sm:$0xf] %vm1455, %v1368
        %1461 = vst.msk [vmem:[#allocation2 + $0x14] sm:$0xf] %vm1455, %v1370
        %1462 = vst.msk [vmem:[#allocation2 + $0x18] sm:$0xf] %vm1455, %v1372
        %1463 = vst.msk [vmem:[#allocation2 + $0x1c] sm:$0xf] %vm1455, %v1374
        %1464 = vst.msk [vmem:[#allocation2 + $0x20] sm:$0xf] %vm1455, %v1376
        %1465 = vst.msk [vmem:[#allocation2 + $0x24] sm:$0xf] %vm1455, %v1378
        %1466 = vst.msk [vmem:[#allocation2 + $0x28] sm:$0xf] %vm1455, %v1380
        %1467 = vst.msk [vmem:[#allocation2 + $0x2c] sm:$0xf] %vm1455, %v1382
        %1468 = vst.msk [vmem:[#allocation2 + $0x30] sm:$0xf] %vm1455, %v1384
        %1469 = vst.msk [vmem:[#allocation2 + $0x34] sm:$0xf] %vm1455, %v1386
        %1470 = vst.msk [vmem:[#allocation2 + $0x38] sm:$0xf] %vm1455, %v1388
        %1471 = vst.msk [vmem:[#allocation2 + $0x3c] sm:$0xf] %vm1455, %v1390
        %1472 = vst.msk [vmem:[#allocation2 + $0x40] sm:$0xf] %vm1455, %v1392
        %1473 = vst.msk [vmem:[#allocation2 + $0x44] sm:$0xf] %vm1455, %v1394
        %1474 = vst.msk [vmem:[#allocation2 + $0x48] sm:$0xf] %vm1455, %v1396
        %1475 = vst.msk [vmem:[#allocation2 + $0x4c] sm:$0xf] %vm1455, %v1398
        %1476 = vst.msk [vmem:[#allocation2 + $0x50] sm:$0xf] %vm1455, %v1400
        %1477 = vst.msk [vmem:[#allocation2 + $0x54] sm:$0xf] %vm1455, %v1402
        %1478 = vst.msk [vmem:[#allocation2 + $0x58] sm:$0xf] %vm1455, %v1404
        %1479 = vst.msk [vmem:[#allocation2 + $0x5c] sm:$0xf] %vm1455, %v1406
        %1480 = vst.msk [vmem:[#allocation2 + $0x60] sm:$0xf] %vm1455, %v1408
        %1481 = vst.msk [vmem:[#allocation2 + $0x64] sm:$0xf] %vm1455, %v1410
        %1482 = vst.msk [vmem:[#allocation2 + $0x68] sm:$0xf] %vm1455, %v1412
        %1483 = vst.msk [vmem:[#allocation2 + $0x6c] sm:$0xf] %vm1455, %v1414
        %1484 = vst.msk [vmem:[#allocation2 + $0x70] sm:$0xf] %vm1455, %v1416
        %1485 = vst.msk [vmem:[#allocation2 + $0x74] sm:$0xf] %vm1455, %v1418
        %1486 = vst.msk [vmem:[#allocation2 + $0x78] sm:$0xf] %vm1455, %v1420
        %1487 = vst.msk [vmem:[#allocation2 + $0x7c] sm:$0xf] %vm1455, %v1422
        %v1489 = vrot.slane %v325, 5
        %v1490 = vrot.slane %v1489, 4
        %v1491 = vrot.slane %v326, 5
        %v1492 = vsel %vm962, %v1490, %v1491
        %v1493 = vrot.slane %v1491, 4
        %v1494 = vrot.slane %v327, 5
        %v1495 = vsel %vm962, %v1493, %v1494
        %1496 = vrot.lane.b32.xlu0 %v973, 20
        %v1497 = vpop.permute.xlu0 %1496
        %1498 = vrot.lane.b32.xlu0 %v976, 20
        %v1499 = vpop.permute.xlu0 %1498
        %1500 = vrot.lane.b32.xlu0 %v980, 20
        %v1501 = vpop.permute.xlu0 %1500
        %1502 = vrot.lane.b32.xlu0 %v983, 20
        %v1503 = vpop.permute.xlu0 %1502
        %1504 = vrot.lane.b32.xlu0 %v987, 20
        %v1505 = vpop.permute.xlu0 %1504
        %1506 = vrot.lane.b32.xlu0 %v990, 20
        %v1507 = vpop.permute.xlu0 %1506
        %1508 = vrot.lane.b32.xlu0 %v994, 20
        %v1509 = vpop.permute.xlu0 %1508
        %1510 = vrot.lane.b32.xlu0 %v997, 20
        %v1511 = vpop.permute.xlu0 %1510
        %1512 = vrot.lane.b32.xlu0 %v1001, 20
        %v1513 = vpop.permute.xlu0 %1512
        %1514 = vrot.lane.b32.xlu0 %v1004, 20
        %v1515 = vpop.permute.xlu0 %1514
        %1516 = vrot.lane.b32.xlu0 %v1008, 20
        %v1517 = vpop.permute.xlu0 %1516
        %1518 = vrot.lane.b32.xlu0 %v1011, 20
        %v1519 = vpop.permute.xlu0 %1518
        %1520 = vrot.lane.b32.xlu0 %v1015, 20
        %v1521 = vpop.permute.xlu0 %1520
        %1522 = vrot.lane.b32.xlu0 %v1018, 20
        %v1523 = vpop.permute.xlu0 %1522
        %1524 = vrot.lane.b32.xlu0 %v1022, 20
        %v1525 = vpop.permute.xlu0 %1524
        %1526 = vrot.lane.b32.xlu0 %v1025, 20
        %v1527 = vpop.permute.xlu0 %1526
        %1528 = vrot.lane.b32.xlu0 %v1029, 20
        %v1529 = vpop.permute.xlu0 %1528
        %1530 = vrot.lane.b32.xlu0 %v1032, 20
        %v1531 = vpop.permute.xlu0 %1530
        %1532 = vrot.lane.b32.xlu0 %v1036, 20
        %v1533 = vpop.permute.xlu0 %1532
        %1534 = vrot.lane.b32.xlu0 %v1039, 20
        %v1535 = vpop.permute.xlu0 %1534
        %1536 = vrot.lane.b32.xlu0 %v1043, 20
        %v1537 = vpop.permute.xlu0 %1536
        %1538 = vrot.lane.b32.xlu0 %v1046, 20
        %v1539 = vpop.permute.xlu0 %1538
        %1540 = vrot.lane.b32.xlu0 %v1050, 20
        %v1541 = vpop.permute.xlu0 %1540
        %1542 = vrot.lane.b32.xlu0 %v1053, 20
        %v1543 = vpop.permute.xlu0 %1542
        %1544 = vrot.lane.b32.xlu0 %v1057, 20
        %v1545 = vpop.permute.xlu0 %1544
        %1546 = vrot.lane.b32.xlu0 %v1060, 20
        %v1547 = vpop.permute.xlu0 %1546
        %1548 = vrot.lane.b32.xlu0 %v1064, 20
        %v1549 = vpop.permute.xlu0 %1548
        %1550 = vrot.lane.b32.xlu0 %v1067, 20
        %v1551 = vpop.permute.xlu0 %1550
        %1552 = vrot.lane.b32.xlu0 %v1071, 20
        %v1553 = vpop.permute.xlu0 %1552
        %1554 = vrot.lane.b32.xlu0 %v1074, 20
        %v1555 = vpop.permute.xlu0 %1554
        %1556 = vrot.lane.b32.xlu0 %v1492, 20
        %v1557 = vpop.permute.xlu0 %1556
        %1558 = vrot.lane.b32.xlu0 %v1495, 20
        %v1559 = vpop.permute.xlu0 %1558
        %vm1592 = vcmask 191648
        %1593 = vst.msk [vmem:[#allocation2] sm:$0xf] %vm1592, %v1497
        %1594 = vst.msk [vmem:[#allocation2 + $0x4] sm:$0xf] %vm1592, %v1499
        %1595 = vst.msk [vmem:[#allocation2 + $0x8] sm:$0xf] %vm1592, %v1501
        %1596 = vst.msk [vmem:[#allocation2 + $0xc] sm:$0xf] %vm1592, %v1503
        %1597 = vst.msk [vmem:[#allocation2 + $0x10] sm:$0xf] %vm1592, %v1505
        %1598 = vst.msk [vmem:[#allocation2 + $0x14] sm:$0xf] %vm1592, %v1507
        %1599 = vst.msk [vmem:[#allocation2 + $0x18] sm:$0xf] %vm1592, %v1509
        %1600 = vst.msk [vmem:[#allocation2 + $0x1c] sm:$0xf] %vm1592, %v1511
        %1601 = vst.msk [vmem:[#allocation2 + $0x20] sm:$0xf] %vm1592, %v1513
        %1602 = vst.msk [vmem:[#allocation2 + $0x24] sm:$0xf] %vm1592, %v1515
        %1603 = vst.msk [vmem:[#allocation2 + $0x28] sm:$0xf] %vm1592, %v1517
        %1604 = vst.msk [vmem:[#allocation2 + $0x2c] sm:$0xf] %vm1592, %v1519
        %1605 = vst.msk [vmem:[#allocation2 + $0x30] sm:$0xf] %vm1592, %v1521
        %1606 = vst.msk [vmem:[#allocation2 + $0x34] sm:$0xf] %vm1592, %v1523
        %1607 = vst.msk [vmem:[#allocation2 + $0x38] sm:$0xf] %vm1592, %v1525
        %1608 = vst.msk [vmem:[#allocation2 + $0x3c] sm:$0xf] %vm1592, %v1527
        %1609 = vst.msk [vmem:[#allocation2 + $0x40] sm:$0xf] %vm1592, %v1529
        %1610 = vst.msk [vmem:[#allocation2 + $0x44] sm:$0xf] %vm1592, %v1531
        %1611 = vst.msk [vmem:[#allocation2 + $0x48] sm:$0xf] %vm1592, %v1533
        %1612 = vst.msk [vmem:[#allocation2 + $0x4c] sm:$0xf] %vm1592, %v1535
        %1613 = vst.msk [vmem:[#allocation2 + $0x50] sm:$0xf] %vm1592, %v1537
        %1614 = vst.msk [vmem:[#allocation2 + $0x54] sm:$0xf] %vm1592, %v1539
        %1615 = vst.msk [vmem:[#allocation2 + $0x58] sm:$0xf] %vm1592, %v1541
        %1616 = vst.msk [vmem:[#allocation2 + $0x5c] sm:$0xf] %vm1592, %v1543
        %1617 = vst.msk [vmem:[#allocation2 + $0x60] sm:$0xf] %vm1592, %v1545
        %1618 = vst.msk [vmem:[#allocation2 + $0x64] sm:$0xf] %vm1592, %v1547
        %1619 = vst.msk [vmem:[#allocation2 + $0x68] sm:$0xf] %vm1592, %v1549
        %1620 = vst.msk [vmem:[#allocation2 + $0x6c] sm:$0xf] %vm1592, %v1551
        %1621 = vst.msk [vmem:[#allocation2 + $0x70] sm:$0xf] %vm1592, %v1553
        %1622 = vst.msk [vmem:[#allocation2 + $0x74] sm:$0xf] %vm1592, %v1555
        %1623 = vst.msk [vmem:[#allocation2 + $0x78] sm:$0xf] %vm1592, %v1557
        %1624 = vst.msk [vmem:[#allocation2 + $0x7c] sm:$0xf] %vm1592, %v1559
        %1627 = vrot.lane.b32.xlu0 %v283, 24
        %v1628 = vpop.permute.xlu0 %1627
        %1629 = vrot.lane.b32.xlu0 %v284, 24
        %v1630 = vpop.permute.xlu0 %1629
        %1631 = vrot.lane.b32.xlu0 %v286, 24
        %v1632 = vpop.permute.xlu0 %1631
        %1633 = vrot.lane.b32.xlu0 %v287, 24
        %v1634 = vpop.permute.xlu0 %1633
        %1635 = vrot.lane.b32.xlu0 %v289, 24
        %v1636 = vpop.permute.xlu0 %1635
        %1637 = vrot.lane.b32.xlu0 %v290, 24
        %v1638 = vpop.permute.xlu0 %1637
        %1639 = vrot.lane.b32.xlu0 %v292, 24
        %v1640 = vpop.permute.xlu0 %1639
        %1641 = vrot.lane.b32.xlu0 %v293, 24
        %v1642 = vpop.permute.xlu0 %1641
        %1643 = vrot.lane.b32.xlu0 %v295, 24
        %v1644 = vpop.permute.xlu0 %1643
        %1645 = vrot.lane.b32.xlu0 %v296, 24
        %v1646 = vpop.permute.xlu0 %1645
        %1647 = vrot.lane.b32.xlu0 %v298, 24
        %v1648 = vpop.permute.xlu0 %1647
        %1649 = vrot.lane.b32.xlu0 %v299, 24
        %v1650 = vpop.permute.xlu0 %1649
        %1651 = vrot.lane.b32.xlu0 %v301, 24
        %v1652 = vpop.permute.xlu0 %1651
        %1653 = vrot.lane.b32.xlu0 %v302, 24
        %v1654 = vpop.permute.xlu0 %1653
        %1655 = vrot.lane.b32.xlu0 %v304, 24
        %v1656 = vpop.permute.xlu0 %1655
        %1657 = vrot.lane.b32.xlu0 %v305, 24
        %v1658 = vpop.permute.xlu0 %1657
        %1659 = vrot.lane.b32.xlu0 %v307, 24
        %v1660 = vpop.permute.xlu0 %1659
        %1661 = vrot.lane.b32.xlu0 %v308, 24
        %v1662 = vpop.permute.xlu0 %1661
        %1663 = vrot.lane.b32.xlu0 %v310, 24
        %v1664 = vpop.permute.xlu0 %1663
        %1665 = vrot.lane.b32.xlu0 %v311, 24
        %v1666 = vpop.permute.xlu0 %1665
        %1667 = vrot.lane.b32.xlu0 %v313, 24
        %v1668 = vpop.permute.xlu0 %1667
        %1669 = vrot.lane.b32.xlu0 %v314, 24
        %v1670 = vpop.permute.xlu0 %1669
        %1671 = vrot.lane.b32.xlu0 %v316, 24
        %v1672 = vpop.permute.xlu0 %1671
        %1673 = vrot.lane.b32.xlu0 %v317, 24
        %v1674 = vpop.permute.xlu0 %1673
        %1675 = vrot.lane.b32.xlu0 %v319, 24
        %v1676 = vpop.permute.xlu0 %1675
        %1677 = vrot.lane.b32.xlu0 %v320, 24
        %v1678 = vpop.permute.xlu0 %1677
        %1679 = vrot.lane.b32.xlu0 %v322, 24
        %v1680 = vpop.permute.xlu0 %1679
        %1681 = vrot.lane.b32.xlu0 %v323, 24
        %v1682 = vpop.permute.xlu0 %1681
        %1683 = vrot.lane.b32.xlu0 %v325, 24
        %v1684 = vpop.permute.xlu0 %1683
        %1685 = vrot.lane.b32.xlu0 %v326, 24
        %v1686 = vpop.permute.xlu0 %1685
        %1687 = vrot.lane.b32.xlu0 %v328, 24
        %v1688 = vpop.permute.xlu0 %1687
        %1689 = vrot.lane.b32.xlu0 %v329, 24
        %v1690 = vpop.permute.xlu0 %1689
        %vm1723 = vcmask 224448
        %1724 = vst.msk [vmem:[#allocation2] sm:$0xf] %vm1723, %v1628
        %1725 = vst.msk [vmem:[#allocation2 + $0x4] sm:$0xf] %vm1723, %v1630
        %1726 = vst.msk [vmem:[#allocation2 + $0x8] sm:$0xf] %vm1723, %v1632
        %1727 = vst.msk [vmem:[#allocation2 + $0xc] sm:$0xf] %vm1723, %v1634
        %1728 = vst.msk [vmem:[#allocation2 + $0x10] sm:$0xf] %vm1723, %v1636
        %1729 = vst.msk [vmem:[#allocation2 + $0x14] sm:$0xf] %vm1723, %v1638
        %1730 = vst.msk [vmem:[#allocation2 + $0x18] sm:$0xf] %vm1723, %v1640
        %1731 = vst.msk [vmem:[#allocation2 + $0x1c] sm:$0xf] %vm1723, %v1642
        %1732 = vst.msk [vmem:[#allocation2 + $0x20] sm:$0xf] %vm1723, %v1644
        %1733 = vst.msk [vmem:[#allocation2 + $0x24] sm:$0xf] %vm1723, %v1646
        %1734 = vst.msk [vmem:[#allocation2 + $0x28] sm:$0xf] %vm1723, %v1648
        %1735 = vst.msk [vmem:[#allocation2 + $0x2c] sm:$0xf] %vm1723, %v1650
        %1736 = vst.msk [vmem:[#allocation2 + $0x30] sm:$0xf] %vm1723, %v1652
        %1737 = vst.msk [vmem:[#allocation2 + $0x34] sm:$0xf] %vm1723, %v1654
        %1738 = vst.msk [vmem:[#allocation2 + $0x38] sm:$0xf] %vm1723, %v1656
        %1739 = vst.msk [vmem:[#allocation2 + $0x3c] sm:$0xf] %vm1723, %v1658
        %1740 = vst.msk [vmem:[#allocation2 + $0x40] sm:$0xf] %vm1723, %v1660
        %1741 = vst.msk [vmem:[#allocation2 + $0x44] sm:$0xf] %vm1723, %v1662
        %1742 = vst.msk [vmem:[#allocation2 + $0x48] sm:$0xf] %vm1723, %v1664
        %1743 = vst.msk [vmem:[#allocation2 + $0x4c] sm:$0xf] %vm1723, %v1666
        %1744 = vst.msk [vmem:[#allocation2 + $0x50] sm:$0xf] %vm1723, %v1668
        %1745 = vst.msk [vmem:[#allocation2 + $0x54] sm:$0xf] %vm1723, %v1670
        %1746 = vst.msk [vmem:[#allocation2 + $0x58] sm:$0xf] %vm1723, %v1672
        %1747 = vst.msk [vmem:[#allocation2 + $0x5c] sm:$0xf] %vm1723, %v1674
        %1748 = vst.msk [vmem:[#allocation2 + $0x60] sm:$0xf] %vm1723, %v1676
        %1749 = vst.msk [vmem:[#allocation2 + $0x64] sm:$0xf] %vm1723, %v1678
        %1750 = vst.msk [vmem:[#allocation2 + $0x68] sm:$0xf] %vm1723, %v1680
        %1751 = vst.msk [vmem:[#allocation2 + $0x6c] sm:$0xf] %vm1723, %v1682
        %1752 = vst.msk [vmem:[#allocation2 + $0x70] sm:$0xf] %vm1723, %v1684
        %1753 = vst.msk [vmem:[#allocation2 + $0x74] sm:$0xf] %vm1723, %v1686
        %1754 = vst.msk [vmem:[#allocation2 + $0x78] sm:$0xf] %vm1723, %v1688
        %1755 = vst.msk [vmem:[#allocation2 + $0x7c] sm:$0xf] %vm1723, %v1690
        %v1757 = vshrl.u32 %v328, 16
        %v1759 = vrot.slane %v1757, 4
        %v1760 = vshll.u32 %v328, 16
        %v1762 = vrot.slane %v1760, 5
        %v1763 = vor.u32 %v1759, %v1762
        %v1764 = vrot.slane %v1763, 4
        %v1766 = vshll.u32 %v329, 16
        %v1768 = vrot.slane %v1766, 5
        %v1769 = vsel %vm398, %v1764, %v1768
        %v1770 = vshrl.u32 %v329, 16
        %v1772 = vrot.slane %v1770, 4
        %v1773 = vor.u32 %v1772, %v1768
        %v1774 = vrot.slane %v1773, 4
        %v1776 = vshll.u32 %v330, 16
        %v1778 = vrot.slane %v1776, 5
        %v1779 = vsel %vm398, %v1774, %v1778
        %1780 = vrot.lane.b32.xlu0 %v460, 28
        %v1781 = vpop.permute.xlu0 %1780
        %1782 = vrot.lane.b32.xlu0 %v470, 28
        %v1783 = vpop.permute.xlu0 %1782
        %1784 = vrot.lane.b32.xlu0 %v484, 28
        %v1785 = vpop.permute.xlu0 %1784
        %1786 = vrot.lane.b32.xlu0 %v494, 28
        %v1787 = vpop.permute.xlu0 %1786
        %1788 = vrot.lane.b32.xlu0 %v508, 28
        %v1789 = vpop.permute.xlu0 %1788
        %1790 = vrot.lane.b32.xlu0 %v518, 28
        %v1791 = vpop.permute.xlu0 %1790
        %1792 = vrot.lane.b32.xlu0 %v532, 28
        %v1793 = vpop.permute.xlu0 %1792
        %1794 = vrot.lane.b32.xlu0 %v542, 28
        %v1795 = vpop.permute.xlu0 %1794
        %1796 = vrot.lane.b32.xlu0 %v556, 28
        %v1797 = vpop.permute.xlu0 %1796
        %1798 = vrot.lane.b32.xlu0 %v566, 28
        %v1799 = vpop.permute.xlu0 %1798
        %1800 = vrot.lane.b32.xlu0 %v580, 28
        %v1801 = vpop.permute.xlu0 %1800
        %1802 = vrot.lane.b32.xlu0 %v590, 28
        %v1803 = vpop.permute.xlu0 %1802
        %1804 = vrot.lane.b32.xlu0 %v604, 28
        %v1805 = vpop.permute.xlu0 %1804
        %1806 = vrot.lane.b32.xlu0 %v614, 28
        %v1807 = vpop.permute.xlu0 %1806
        %1808 = vrot.lane.b32.xlu0 %v628, 28
        %v1809 = vpop.permute.xlu0 %1808
        %1810 = vrot.lane.b32.xlu0 %v638, 28
        %v1811 = vpop.permute.xlu0 %1810
        %1812 = vrot.lane.b32.xlu0 %v652, 28
        %v1813 = vpop.permute.xlu0 %1812
        %1814 = vrot.lane.b32.xlu0 %v662, 28
        %v1815 = vpop.permute.xlu0 %1814
        %1816 = vrot.lane.b32.xlu0 %v676, 28
        %v1817 = vpop.permute.xlu0 %1816
        %1818 = vrot.lane.b32.xlu0 %v686, 28
        %v1819 = vpop.permute.xlu0 %1818
        %1820 = vrot.lane.b32.xlu0 %v700, 28
        %v1821 = vpop.permute.xlu0 %1820
        %1822 = vrot.lane.b32.xlu0 %v710, 28
        %v1823 = vpop.permute.xlu0 %1822
        %1824 = vrot.lane.b32.xlu0 %v724, 28
        %v1825 = vpop.permute.xlu0 %1824
        %1826 = vrot.lane.b32.xlu0 %v734, 28
        %v1827 = vpop.permute.xlu0 %1826
        %1828 = vrot.lane.b32.xlu0 %v748, 28
        %v1829 = vpop.permute.xlu0 %1828
        %1830 = vrot.lane.b32.xlu0 %v758, 28
        %v1831 = vpop.permute.xlu0 %1830
        %1832 = vrot.lane.b32.xlu0 %v772, 28
        %v1833 = vpop.permute.xlu0 %1832
        %1834 = vrot.lane.b32.xlu0 %v782, 28
        %v1835 = vpop.permute.xlu0 %1834
        %1836 = vrot.lane.b32.xlu0 %v1348, 28
        %v1837 = vpop.permute.xlu0 %1836
        %1838 = vrot.lane.b32.xlu0 %v1358, 28
        %v1839 = vpop.permute.xlu0 %1838
        %1840 = vrot.lane.b32.xlu0 %v1769, 28
        %v1841 = vpop.permute.xlu0 %1840
        %1842 = vrot.lane.b32.xlu0 %v1779, 28
        %v1843 = vpop.permute.xlu0 %1842
        %vm1876 = vcmask 257248
        %1877 = vst.msk [vmem:[#allocation2] sm:$0xf] %vm1876, %v1781
        %1878 = vst.msk [vmem:[#allocation2 + $0x4] sm:$0xf] %vm1876, %v1783
        %1879 = vst.msk [vmem:[#allocation2 + $0x8] sm:$0xf] %vm1876, %v1785
        %1880 = vst.msk [vmem:[#allocation2 + $0xc] sm:$0xf] %vm1876, %v1787
        %1881 = vst.msk [vmem:[#allocation2 + $0x10] sm:$0xf] %vm1876, %v1789
        %1882 = vst.msk [vmem:[#allocation2 + $0x14] sm:$0xf] %vm1876, %v1791
        %1883 = vst.msk [vmem:[#allocation2 + $0x18] sm:$0xf] %vm1876, %v1793
        %1884 = vst.msk [vmem:[#allocation2 + $0x1c] sm:$0xf] %vm1876, %v1795
        %1885 = vst.msk [vmem:[#allocation2 + $0x20] sm:$0xf] %vm1876, %v1797
        %1886 = vst.msk [vmem:[#allocation2 + $0x24] sm:$0xf] %vm1876, %v1799
        %1887 = vst.msk [vmem:[#allocation2 + $0x28] sm:$0xf] %vm1876, %v1801
        %1888 = vst.msk [vmem:[#allocation2 + $0x2c] sm:$0xf] %vm1876, %v1803
        %1889 = vst.msk [vmem:[#allocation2 + $0x30] sm:$0xf] %vm1876, %v1805
        %1890 = vst.msk [vmem:[#allocation2 + $0x34] sm:$0xf] %vm1876, %v1807
        %1891 = vst.msk [vmem:[#allocation2 + $0x38] sm:$0xf] %vm1876, %v1809
        %1892 = vst.msk [vmem:[#allocation2 + $0x3c] sm:$0xf] %vm1876, %v1811
        %1893 = vst.msk [vmem:[#allocation2 + $0x40] sm:$0xf] %vm1876, %v1813
        %1894 = vst.msk [vmem:[#allocation2 + $0x44] sm:$0xf] %vm1876, %v1815
        %1895 = vst.msk [vmem:[#allocation2 + $0x48] sm:$0xf] %vm1876, %v1817
        %1896 = vst.msk [vmem:[#allocation2 + $0x4c] sm:$0xf] %vm1876, %v1819
        %1897 = vst.msk [vmem:[#allocation2 + $0x50] sm:$0xf] %vm1876, %v1821
        %1898 = vst.msk [vmem:[#allocation2 + $0x54] sm:$0xf] %vm1876, %v1823
        %1899 = vst.msk [vmem:[#allocation2 + $0x58] sm:$0xf] %vm1876, %v1825
        %1900 = vst.msk [vmem:[#allocation2 + $0x5c] sm:$0xf] %vm1876, %v1827
        %1901 = vst.msk [vmem:[#allocation2 + $0x60] sm:$0xf] %vm1876, %v1829
        %1902 = vst.msk [vmem:[#allocation2 + $0x64] sm:$0xf] %vm1876, %v1831
        %1903 = vst.msk [vmem:[#allocation2 + $0x68] sm:$0xf] %vm1876, %v1833
        %1904 = vst.msk [vmem:[#allocation2 + $0x6c] sm:$0xf] %vm1876, %v1835
        %1905 = vst.msk [vmem:[#allocation2 + $0x70] sm:$0xf] %vm1876, %v1837
        %1906 = vst.msk [vmem:[#allocation2 + $0x74] sm:$0xf] %vm1876, %v1839
        %1907 = vst.msk [vmem:[#allocation2 + $0x78] sm:$0xf] %vm1876, %v1841
        %1908 = vst.msk [vmem:[#allocation2 + $0x7c] sm:$0xf] %vm1876, %v1843
        %v1910 = vrot.slane %v328, 5
        %v1911 = vrot.slane %v1910, 4
        %v1912 = vrot.slane %v329, 5
        %v1913 = vsel %vm962, %v1911, %v1912
        %v1914 = vrot.slane %v1912, 4
        %v1915 = vrot.slane %v330, 5
        %v1916 = vsel %vm962, %v1914, %v1915
        %1917 = vrot.lane.b32.xlu0 %v980, 32
        %v1918 = vpop.permute.xlu0 %1917
        %1919 = vrot.lane.b32.xlu0 %v983, 32
        %v1920 = vpop.permute.xlu0 %1919
        %1921 = vrot.lane.b32.xlu0 %v987, 32
        %v1922 = vpop.permute.xlu0 %1921
        %1923 = vrot.lane.b32.xlu0 %v990, 32
        %v1924 = vpop.permute.xlu0 %1923
        %1925 = vrot.lane.b32.xlu0 %v994, 32
        %v1926 = vpop.permute.xlu0 %1925
        %1927 = vrot.lane.b32.xlu0 %v997, 32
        %v1928 = vpop.permute.xlu0 %1927
        %1929 = vrot.lane.b32.xlu0 %v1001, 32
        %v1930 = vpop.permute.xlu0 %1929
        %1931 = vrot.lane.b32.xlu0 %v1004, 32
        %v1932 = vpop.permute.xlu0 %1931
        %1933 = vrot.lane.b32.xlu0 %v1008, 32
        %v1934 = vpop.permute.xlu0 %1933
        %1935 = vrot.lane.b32.xlu0 %v1011, 32
        %v1936 = vpop.permute.xlu0 %1935
        %1937 = vrot.lane.b32.xlu0 %v1015, 32
        %v1938 = vpop.permute.xlu0 %1937
        %1939 = vrot.lane.b32.xlu0 %v1018, 32
        %v1940 = vpop.permute.xlu0 %1939
        %1941 = vrot.lane.b32.xlu0 %v1022, 32
        %v1942 = vpop.permute.xlu0 %1941
        %1943 = vrot.lane.b32.xlu0 %v1025, 32
        %v1944 = vpop.permute.xlu0 %1943
        %1945 = vrot.lane.b32.xlu0 %v1029, 32
        %v1946 = vpop.permute.xlu0 %1945
        %1947 = vrot.lane.b32.xlu0 %v1032, 32
        %v1948 = vpop.permute.xlu0 %1947
        %1949 = vrot.lane.b32.xlu0 %v1036, 32
        %v1950 = vpop.permute.xlu0 %1949
        %1951 = vrot.lane.b32.xlu0 %v1039, 32
        %v1952 = vpop.permute.xlu0 %1951
        %1953 = vrot.lane.b32.xlu0 %v1043, 32
        %v1954 = vpop.permute.xlu0 %1953
        %1955 = vrot.lane.b32.xlu0 %v1046, 32
        %v1956 = vpop.permute.xlu0 %1955
        %1957 = vrot.lane.b32.xlu0 %v1050, 32
        %v1958 = vpop.permute.xlu0 %1957
        %1959 = vrot.lane.b32.xlu0 %v1053, 32
        %v1960 = vpop.permute.xlu0 %1959
        %1961 = vrot.lane.b32.xlu0 %v1057, 32
        %v1962 = vpop.permute.xlu0 %1961
        %1963 = vrot.lane.b32.xlu0 %v1060, 32
        %v1964 = vpop.permute.xlu0 %1963
        %1965 = vrot.lane.b32.xlu0 %v1064, 32
        %v1966 = vpop.permute.xlu0 %1965
        %1967 = vrot.lane.b32.xlu0 %v1067, 32
        %v1968 = vpop.permute.xlu0 %1967
        %1969 = vrot.lane.b32.xlu0 %v1071, 32
        %v1970 = vpop.permute.xlu0 %1969
        %1971 = vrot.lane.b32.xlu0 %v1074, 32
        %v1972 = vpop.permute.xlu0 %1971
        %1973 = vrot.lane.b32.xlu0 %v1492, 32
        %v1974 = vpop.permute.xlu0 %1973
        %1975 = vrot.lane.b32.xlu0 %v1495, 32
        %v1976 = vpop.permute.xlu0 %1975
        %1977 = vrot.lane.b32.xlu0 %v1913, 32
        %v1978 = vpop.permute.xlu0 %1977
        %1979 = vrot.lane.b32.xlu0 %v1916, 32
        %v1980 = vpop.permute.xlu0 %1979
        %vm2013 = vcmask 290048
        %2014 = vst.msk [vmem:[#allocation2] sm:$0xf] %vm2013, %v1918
        %2015 = vst.msk [vmem:[#allocation2 + $0x4] sm:$0xf] %vm2013, %v1920
        %2016 = vst.msk [vmem:[#allocation2 + $0x8] sm:$0xf] %vm2013, %v1922
        %2017 = vst.msk [vmem:[#allocation2 + $0xc] sm:$0xf] %vm2013, %v1924
        %2018 = vst.msk [vmem:[#allocation2 + $0x10] sm:$0xf] %vm2013, %v1926
        %2019 = vst.msk [vmem:[#allocation2 + $0x14] sm:$0xf] %vm2013, %v1928
        %2020 = vst.msk [vmem:[#allocation2 + $0x18] sm:$0xf] %vm2013, %v1930
        %2021 = vst.msk [vmem:[#allocation2 + $0x1c] sm:$0xf] %vm2013, %v1932
        %2022 = vst.msk [vmem:[#allocation2 + $0x20] sm:$0xf] %vm2013, %v1934
        %2023 = vst.msk [vmem:[#allocation2 + $0x24] sm:$0xf] %vm2013, %v1936
        %2024 = vst.msk [vmem:[#allocation2 + $0x28] sm:$0xf] %vm2013, %v1938
        %2025 = vst.msk [vmem:[#allocation2 + $0x2c] sm:$0xf] %vm2013, %v1940
        %2026 = vst.msk [vmem:[#allocation2 + $0x30] sm:$0xf] %vm2013, %v1942
        %2027 = vst.msk [vmem:[#allocation2 + $0x34] sm:$0xf] %vm2013, %v1944
        %2028 = vst.msk [vmem:[#allocation2 + $0x38] sm:$0xf] %vm2013, %v1946
        %2029 = vst.msk [vmem:[#allocation2 + $0x3c] sm:$0xf] %vm2013, %v1948
        %2030 = vst.msk [vmem:[#allocation2 + $0x40] sm:$0xf] %vm2013, %v1950
        %2031 = vst.msk [vmem:[#allocation2 + $0x44] sm:$0xf] %vm2013, %v1952
        %2032 = vst.msk [vmem:[#allocation2 + $0x48] sm:$0xf] %vm2013, %v1954
        %2033 = vst.msk [vmem:[#allocation2 + $0x4c] sm:$0xf] %vm2013, %v1956
        %2034 = vst.msk [vmem:[#allocation2 + $0x50] sm:$0xf] %vm2013, %v1958
        %2035 = vst.msk [vmem:[#allocation2 + $0x54] sm:$0xf] %vm2013, %v1960
        %2036 = vst.msk [vmem:[#allocation2 + $0x58] sm:$0xf] %vm2013, %v1962
        %2037 = vst.msk [vmem:[#allocation2 + $0x5c] sm:$0xf] %vm2013, %v1964
        %2038 = vst.msk [vmem:[#allocation2 + $0x60] sm:$0xf] %vm2013, %v1966
        %2039 = vst.msk [vmem:[#allocation2 + $0x64] sm:$0xf] %vm2013, %v1968
        %2040 = vst.msk [vmem:[#allocation2 + $0x68] sm:$0xf] %vm2013, %v1970
        %2041 = vst.msk [vmem:[#allocation2 + $0x6c] sm:$0xf] %vm2013, %v1972
        %2042 = vst.msk [vmem:[#allocation2 + $0x70] sm:$0xf] %vm2013, %v1974
        %2043 = vst.msk [vmem:[#allocation2 + $0x74] sm:$0xf] %vm2013, %v1976
        %2044 = vst.msk [vmem:[#allocation2 + $0x78] sm:$0xf] %vm2013, %v1978
        %2045 = vst.msk [vmem:[#allocation2 + $0x7c] sm:$0xf] %vm2013, %v1980
        %v2046 = vld [vmem:[#allocation2] sm:$0xf]
        %v2047 = vld [vmem:[#allocation2 + $0x4] sm:$0xf]
        %v2048 = vld [vmem:[#allocation2 + $0x8] sm:$0xf]
        %v2049 = vld [vmem:[#allocation2 + $0xc] sm:$0xf]
        %v2050 = vld [vmem:[#allocation2 + $0x10] sm:$0xf]
        %v2051 = vld [vmem:[#allocation2 + $0x14] sm:$0xf]
        %v2052 = vld [vmem:[#allocation2 + $0x18] sm:$0xf]
        %v2053 = vld [vmem:[#allocation2 + $0x1c] sm:$0xf]
        %v2054 = vld [vmem:[#allocation2 + $0x20] sm:$0xf]
        %v2055 = vld [vmem:[#allocation2 + $0x24] sm:$0xf]
        %v2056 = vld [vmem:[#allocation2 + $0x28] sm:$0xf]
        %v2057 = vld [vmem:[#allocation2 + $0x2c] sm:$0xf]
        %v2058 = vld [vmem:[#allocation2 + $0x30] sm:$0xf]
        %v2059 = vld [vmem:[#allocation2 + $0x34] sm:$0xf]
        %v2060 = vld [vmem:[#allocation2 + $0x38] sm:$0xf]
        %v2061 = vld [vmem:[#allocation2 + $0x3c] sm:$0xf]
        %v2062 = vld [vmem:[#allocation2 + $0x40] sm:$0xf]
        %v2063 = vld [vmem:[#allocation2 + $0x44] sm:$0xf]
        %v2064 = vld [vmem:[#allocation2 + $0x48] sm:$0xf]
        %v2065 = vld [vmem:[#allocation2 + $0x4c] sm:$0xf]
        %v2066 = vld [vmem:[#allocation2 + $0x50] sm:$0xf]
        %v2067 = vld [vmem:[#allocation2 + $0x54] sm:$0xf]
        %v2068 = vld [vmem:[#allocation2 + $0x58] sm:$0xf]
        %v2069 = vld [vmem:[#allocation2 + $0x5c] sm:$0xf]
        %v2070 = vld [vmem:[#allocation2 + $0x60] sm:$0xf]
        %v2071 = vld [vmem:[#allocation2 + $0x64] sm:$0xf]
        %v2072 = vld [vmem:[#allocation2 + $0x68] sm:$0xf]
        %v2073 = vld [vmem:[#allocation2 + $0x6c] sm:$0xf]
        %v2074 = vld [vmem:[#allocation2 + $0x70] sm:$0xf]
        %v2075 = vld [vmem:[#allocation2 + $0x74] sm:$0xf]
        %v2076 = vld [vmem:[#allocation2 + $0x78] sm:$0xf]
        %v2077 = vld [vmem:[#allocation2 + $0x7c] sm:$0xf]
        %v2078 = vld [vmem:[%s1] sm:$0xf]
        %v2079 = vld [vmem:[%s1 + $0x4] sm:$0xf]
        %v2080 = vld [vmem:[%s1 + $0x8] sm:$0xf]
        %v2081 = vld [vmem:[%s1 + $0xc] sm:$0xf]
        %v2082 = vld [vmem:[%s1 + $0x10] sm:$0xf]
        %v2083 = vld [vmem:[%s1 + $0x14] sm:$0xf]
        %v2084 = vld [vmem:[%s1 + $0x18] sm:$0xf]
        %v2085 = vld [vmem:[%s1 + $0x1c] sm:$0xf]
        %v2086 = vld [vmem:[%s1 + $0x20] sm:$0xf]
        %v2087 = vld [vmem:[%s1 + $0x24] sm:$0xf]
        %v2088 = vld [vmem:[%s1 + $0x28] sm:$0xf]
        %v2089 = vld [vmem:[%s1 + $0x2c] sm:$0xf]
        %v2090 = vld [vmem:[%s1 + $0x30] sm:$0xf]
        %v2091 = vld [vmem:[%s1 + $0x34] sm:$0xf]
        %v2092 = vld [vmem:[%s1 + $0x38] sm:$0xf]
        %v2093 = vld [vmem:[%s1 + $0x3c] sm:$0xf]
        %v2094 = vld [vmem:[%s2] sm:$0x1]
        %v2096 = vlaneseq
        %v2097 = vshrl.u32 %v2096, 7
        %v2098 = vsub.s32 0, %v2097
        %v2099 = vrot.slane %v2094, %v2098
        %v2133 = vunpack.c.l.b16 %v2046
        %v2134 = vunpack.c.l.b16 %v2047
        %v2135 = vunpack.c.l.b16 %v2048
        %v2136 = vunpack.c.l.b16 %v2049
        %v2137 = vunpack.c.l.b16 %v2050
        %v2138 = vunpack.c.l.b16 %v2051
        %v2139 = vunpack.c.l.b16 %v2052
        %v2140 = vunpack.c.l.b16 %v2053
        %v2141 = vunpack.c.l.b16 %v2054
        %v2142 = vunpack.c.l.b16 %v2055
        %v2143 = vunpack.c.l.b16 %v2056
        %v2144 = vunpack.c.l.b16 %v2057
        %v2145 = vunpack.c.l.b16 %v2058
        %v2146 = vunpack.c.l.b16 %v2059
        %v2147 = vunpack.c.l.b16 %v2060
        %v2148 = vunpack.c.l.b16 %v2061
        %v2149 = vunpack.c.l.b16 %v2062
        %v2150 = vunpack.c.l.b16 %v2063
        %v2151 = vunpack.c.l.b16 %v2064
        %v2152 = vunpack.c.l.b16 %v2065
        %v2153 = vunpack.c.l.b16 %v2066
        %v2154 = vunpack.c.l.b16 %v2067
        %v2155 = vunpack.c.l.b16 %v2068
        %v2156 = vunpack.c.l.b16 %v2069
        %v2157 = vunpack.c.l.b16 %v2070
        %v2158 = vunpack.c.l.b16 %v2071
        %v2159 = vunpack.c.l.b16 %v2072
        %v2160 = vunpack.c.l.b16 %v2073
        %v2161 = vunpack.c.l.b16 %v2074
        %v2162 = vunpack.c.l.b16 %v2075
        %v2163 = vunpack.c.l.b16 %v2076
        %v2164 = vunpack.c.l.b16 %v2077
        %v2165 = vpack.c.b16 %v2134, %v2133
        %v2166 = vpack.c.b16 %v2136, %v2135
        %v2167 = vpack.c.b16 %v2138, %v2137
        %v2168 = vpack.c.b16 %v2140, %v2139
        %v2169 = vpack.c.b16 %v2142, %v2141
        %v2170 = vpack.c.b16 %v2144, %v2143
        %v2171 = vpack.c.b16 %v2146, %v2145
        %v2172 = vpack.c.b16 %v2148, %v2147
        %v2173 = vpack.c.b16 %v2150, %v2149
        %v2174 = vpack.c.b16 %v2152, %v2151
        %v2175 = vpack.c.b16 %v2154, %v2153
        %v2176 = vpack.c.b16 %v2156, %v2155
        %v2177 = vpack.c.b16 %v2158, %v2157
        %v2178 = vpack.c.b16 %v2160, %v2159
        %v2179 = vpack.c.b16 %v2162, %v2161
        %v2180 = vpack.c.b16 %v2164, %v2163
        %v2213 = vunpack.c.l.b16 %v2078
        %v2214 = vunpack.c.l.b16 %v2079
        %v2215 = vunpack.c.l.b16 %v2080
        %v2216 = vunpack.c.l.b16 %v2081
        %v2217 = vunpack.c.l.b16 %v2082
        %v2218 = vunpack.c.l.b16 %v2083
        %v2219 = vunpack.c.l.b16 %v2084
        %v2220 = vunpack.c.l.b16 %v2085
        %v2221 = vunpack.c.l.b16 %v2086
        %v2222 = vunpack.c.l.b16 %v2087
        %v2223 = vunpack.c.l.b16 %v2088
        %v2224 = vunpack.c.l.b16 %v2089
        %v2225 = vunpack.c.l.b16 %v2090
        %v2226 = vunpack.c.l.b16 %v2091
        %v2227 = vunpack.c.l.b16 %v2092
        %v2228 = vunpack.c.l.b16 %v2093
        %v2229 = vpack.c.b16 %v2214, %v2213
        %v2230 = vpack.c.b16 %v2216, %v2215
        %v2231 = vpack.c.b16 %v2218, %v2217
        %v2232 = vpack.c.b16 %v2220, %v2219
        %v2233 = vpack.c.b16 %v2222, %v2221
        %v2234 = vpack.c.b16 %v2224, %v2223
        %v2235 = vpack.c.b16 %v2226, %v2225
        %v2236 = vpack.c.b16 %v2228, %v2227
        %2245 = vmatprep.subr.bf16.mxu0 0
        %2246 = vmatpush1.bf16.msra.mxu0 %v2236
        %2247 = vmatprep.subr.bf16.mxu0 0
        %2248 = vmatpush1.bf16.msra.mxu0 %v2235
        %2249 = vmatprep.subr.bf16.mxu0 0
        %2250 = vmatpush1.bf16.msra.mxu0 %v2234
        %2251 = vmatprep.subr.bf16.mxu0 0
        %2252 = vmatpush1.bf16.msra.mxu0 %v2233
        %2253 = vmatprep.subr.bf16.mxu0 0
        %2254 = vmatpush1.bf16.msra.mxu0 %v2232
        %2255 = vmatprep.subr.bf16.mxu0 0
        %2256 = vmatpush1.bf16.msra.mxu0 %v2231
        %2257 = vmatprep.subr.bf16.mxu0 0
        %2258 = vmatpush1.bf16.msra.mxu0 %v2230
        %2259 = vmatprep.subr.bf16.mxu0 0
        %2260 = vmatpush1.bf16.msra.mxu0 %v2229
        %2261 = vmatprep.subr.bf16.mxu0 0
        %2262 = vmatpush2.bf16.msra.mxu0 0
        %2263 = vmatprep.subr.bf16.mxu0 0
        %2264 = vmatpush2.bf16.msra.mxu0 0
        %2265 = vmatprep.subr.bf16.mxu0 0
        %2266 = vmatpush2.bf16.msra.mxu0 0
        %2267 = vmatprep.subr.bf16.mxu0 0
        %2268 = vmatpush2.bf16.msra.mxu0 0
        %2269 = vmatprep.subr.bf16.mxu0 0
        %2270 = vmatpush2.bf16.msra.mxu0 0
        %2271 = vmatprep.subr.bf16.mxu0 0
        %2272 = vmatpush2.bf16.msra.mxu0 0
        %2273 = vmatprep.subr.bf16.mxu0 0
        %2274 = vmatpush2.bf16.msra.mxu0 0
        %2275 = vmatprep.subr.bf16.mxu0 0
        %2276 = vmatpush2.bf16.msra.mxu0 0
        %2277 = vmatprep.mubr.bf16.mxu0 0
        %2278 = vmatmul.mubr.bf16.gmra.mxu0 %v2165
        %v2279 = vpop.f32.mrf.mxu0
        %v2280 = vadd.f32 %v2099, %v2279
        %v2281 = vpop.f32.mrf.mxu0
        %v2282 = vpop.f32.mrf.mxu0
        %v2283 = vadd.f32 %v2099, %v2282
        %v2284 = vpop.f32.mrf.mxu0
        %2285 = vmatprep.mubr.bf16.mxu0 0
        %2286 = vmatmul.mubr.bf16.gmra.mxu0 %v2166
        %v2287 = vpop.f32.mrf.mxu0
        %v2288 = vadd.f32 %v2099, %v2287
        %v2289 = vpop.f32.mrf.mxu0
        %v2290 = vpop.f32.mrf.mxu0
        %v2291 = vadd.f32 %v2099, %v2290
        %v2292 = vpop.f32.mrf.mxu0
        %2293 = vmatprep.mubr.bf16.mxu0 0
        %2294 = vmatmul.mubr.bf16.gmra.mxu0 %v2167
        %v2295 = vpop.f32.mrf.mxu0
        %v2296 = vadd.f32 %v2099, %v2295
        %v2297 = vpop.f32.mrf.mxu0
        %v2298 = vpop.f32.mrf.mxu0
        %v2299 = vadd.f32 %v2099, %v2298
        %v2300 = vpop.f32.mrf.mxu0
        %2301 = vmatprep.mubr.bf16.mxu0 0
        %2302 = vmatmul.mubr.bf16.gmra.mxu0 %v2168
        %v2303 = vpop.f32.mrf.mxu0
        %v2304 = vadd.f32 %v2099, %v2303
        %v2305 = vpop.f32.mrf.mxu0
        %v2306 = vpop.f32.mrf.mxu0
        %v2307 = vadd.f32 %v2099, %v2306
        %v2308 = vpop.f32.mrf.mxu0
        %2309 = vmatprep.mubr.bf16.mxu0 0
        %2310 = vmatmul.mubr.bf16.gmra.mxu0 %v2169
        %v2311 = vpop.f32.mrf.mxu0
        %v2312 = vadd.f32 %v2099, %v2311
        %v2313 = vpop.f32.mrf.mxu0
        %v2314 = vpop.f32.mrf.mxu0
        %v2315 = vadd.f32 %v2099, %v2314
        %v2316 = vpop.f32.mrf.mxu0
        %2317 = vmatprep.mubr.bf16.mxu0 0
        %2318 = vmatmul.mubr.bf16.gmra.mxu0 %v2170
        %v2319 = vpop.f32.mrf.mxu0
        %v2320 = vadd.f32 %v2099, %v2319
        %v2321 = vpop.f32.mrf.mxu0
        %v2322 = vpop.f32.mrf.mxu0
        %v2323 = vadd.f32 %v2099, %v2322
        %v2324 = vpop.f32.mrf.mxu0
        %2325 = vmatprep.mubr.bf16.mxu0 0
        %2326 = vmatmul.mubr.bf16.gmra.mxu0 %v2171
        %v2327 = vpop.f32.mrf.mxu0
        %v2328 = vadd.f32 %v2099, %v2327
        %v2329 = vpop.f32.mrf.mxu0
        %v2330 = vpop.f32.mrf.mxu0
        %v2331 = vadd.f32 %v2099, %v2330
        %v2332 = vpop.f32.mrf.mxu0
        %2333 = vmatprep.mubr.bf16.mxu0 0
        %2334 = vmatmul.mubr.bf16.gmra.mxu0 %v2172
        %v2335 = vpop.f32.mrf.mxu0
        %v2336 = vadd.f32 %v2099, %v2335
        %v2337 = vpop.f32.mrf.mxu0
        %v2338 = vpop.f32.mrf.mxu0
        %v2339 = vadd.f32 %v2099, %v2338
        %v2340 = vpop.f32.mrf.mxu0
        %2341 = vmatprep.mubr.bf16.mxu0 0
        %2342 = vmatmul.mubr.bf16.gmra.mxu0 %v2173
        %v2343 = vpop.f32.mrf.mxu0
        %v2344 = vadd.f32 %v2099, %v2343
        %v2345 = vpop.f32.mrf.mxu0
        %v2346 = vpop.f32.mrf.mxu0
        %v2347 = vadd.f32 %v2099, %v2346
        %v2348 = vpop.f32.mrf.mxu0
        %2349 = vmatprep.mubr.bf16.mxu0 0
        %2350 = vmatmul.mubr.bf16.gmra.mxu0 %v2174
        %v2351 = vpop.f32.mrf.mxu0
        %v2352 = vadd.f32 %v2099, %v2351
        %v2353 = vpop.f32.mrf.mxu0
        %v2354 = vpop.f32.mrf.mxu0
        %v2355 = vadd.f32 %v2099, %v2354
        %v2356 = vpop.f32.mrf.mxu0
        %2357 = vmatprep.mubr.bf16.mxu0 0
        %2358 = vmatmul.mubr.bf16.gmra.mxu0 %v2175
        %v2359 = vpop.f32.mrf.mxu0
        %v2360 = vadd.f32 %v2099, %v2359
        %v2361 = vpop.f32.mrf.mxu0
        %v2362 = vpop.f32.mrf.mxu0
        %v2363 = vadd.f32 %v2099, %v2362
        %v2364 = vpop.f32.mrf.mxu0
        %2365 = vmatprep.mubr.bf16.mxu0 0
        %2366 = vmatmul.mubr.bf16.gmra.mxu0 %v2176
        %v2367 = vpop.f32.mrf.mxu0
        %v2368 = vadd.f32 %v2099, %v2367
        %v2369 = vpop.f32.mrf.mxu0
        %v2370 = vpop.f32.mrf.mxu0
        %v2371 = vadd.f32 %v2099, %v2370
        %v2372 = vpop.f32.mrf.mxu0
        %2373 = vmatprep.mubr.bf16.mxu0 0
        %2374 = vmatmul.mubr.bf16.gmra.mxu0 %v2177
        %v2375 = vpop.f32.mrf.mxu0
        %v2376 = vadd.f32 %v2099, %v2375
        %v2377 = vpop.f32.mrf.mxu0
        %v2378 = vpop.f32.mrf.mxu0
        %v2379 = vadd.f32 %v2099, %v2378
        %v2380 = vpop.f32.mrf.mxu0
        %2381 = vmatprep.mubr.bf16.mxu0 0
        %2382 = vmatmul.mubr.bf16.gmra.mxu0 %v2178
        %v2383 = vpop.f32.mrf.mxu0
        %v2384 = vadd.f32 %v2099, %v2383
        %v2385 = vpop.f32.mrf.mxu0
        %v2386 = vpop.f32.mrf.mxu0
        %v2387 = vadd.f32 %v2099, %v2386
        %v2388 = vpop.f32.mrf.mxu0
        %2389 = vmatprep.mubr.bf16.mxu0 0
        %2390 = vmatmul.mubr.bf16.gmra.mxu0 %v2179
        %v2391 = vpop.f32.mrf.mxu0
        %v2392 = vadd.f32 %v2099, %v2391
        %v2393 = vpop.f32.mrf.mxu0
        %v2394 = vpop.f32.mrf.mxu0
        %v2395 = vadd.f32 %v2099, %v2394
        %v2396 = vpop.f32.mrf.mxu0
        %2397 = vmatprep.mubr.bf16.mxu0 0
        %2398 = vmatmul.mubr.bf16.gmra.mxu0 %v2180
        %v2399 = vpop.f32.mrf.mxu0
        %v2400 = vadd.f32 %v2099, %v2399
        %v2401 = vpop.f32.mrf.mxu0
        %v2402 = vpop.f32.mrf.mxu0
        %v2403 = vadd.f32 %v2099, %v2402
        %v2404 = vpop.f32.mrf.mxu0
        %2405 = vdwg.mxu0
        %v2406 = vmax.f32 %v2280, 0.0
        %v2407 = vmax.f32 %v2283, 0.0
        %v2408 = vmax.f32 %v2288, 0.0
        %v2409 = vmax.f32 %v2291, 0.0
        %v2410 = vmax.f32 %v2296, 0.0
        %v2411 = vmax.f32 %v2299, 0.0
        %v2412 = vmax.f32 %v2304, 0.0
        %v2413 = vmax.f32 %v2307, 0.0
        %v2414 = vmax.f32 %v2312, 0.0
        %v2415 = vmax.f32 %v2315, 0.0
        %v2416 = vmax.f32 %v2320, 0.0
        %v2417 = vmax.f32 %v2323, 0.0
        %v2418 = vmax.f32 %v2328, 0.0
        %v2419 = vmax.f32 %v2331, 0.0
        %v2420 = vmax.f32 %v2336, 0.0
        %v2421 = vmax.f32 %v2339, 0.0
        %v2422 = vmax.f32 %v2344, 0.0
        %v2423 = vmax.f32 %v2347, 0.0
        %v2424 = vmax.f32 %v2352, 0.0
        %v2425 = vmax.f32 %v2355, 0.0
        %v2426 = vmax.f32 %v2360, 0.0
        %v2427 = vmax.f32 %v2363, 0.0
        %v2428 = vmax.f32 %v2368, 0.0
        %v2429 = vmax.f32 %v2371, 0.0
        %v2430 = vmax.f32 %v2376, 0.0
        %v2431 = vmax.f32 %v2379, 0.0
        %v2432 = vmax.f32 %v2384, 0.0
        %v2433 = vmax.f32 %v2387, 0.0
        %v2434 = vmax.f32 %v2392, 0.0
        %v2435 = vmax.f32 %v2395, 0.0
        %v2436 = vmax.f32 %v2400, 0.0
        %v2437 = vmax.f32 %v2403, 0.0
        %v2438 = vadd.f32 %v2406, %v2407
        %v2439 = vadd.f32 %v2438, %v2408
        %v2440 = vadd.f32 %v2439, %v2409
        %v2441 = vadd.f32 %v2440, %v2410
        %v2442 = vadd.f32 %v2441, %v2411
        %v2443 = vadd.f32 %v2442, %v2412
        %v2444 = vadd.f32 %v2443, %v2413
        %v2445 = vadd.f32 %v2444, %v2414
        %v2446 = vadd.f32 %v2445, %v2415
        %v2447 = vadd.f32 %v2446, %v2416
        %v2448 = vadd.f32 %v2447, %v2417
        %v2449 = vadd.f32 %v2448, %v2418
        %v2450 = vadd.f32 %v2449, %v2419
        %v2451 = vadd.f32 %v2450, %v2420
        %v2452 = vadd.f32 %v2451, %v2421
        %v2453 = vadd.f32 %v2452, %v2422
        %v2454 = vadd.f32 %v2453, %v2423
        %v2455 = vadd.f32 %v2454, %v2424
        %v2456 = vadd.f32 %v2455, %v2425
        %v2457 = vadd.f32 %v2456, %v2426
        %v2458 = vadd.f32 %v2457, %v2427
        %v2459 = vadd.f32 %v2458, %v2428
        %v2460 = vadd.f32 %v2459, %v2429
        %v2461 = vadd.f32 %v2460, %v2430
        %v2462 = vadd.f32 %v2461, %v2431
        %v2463 = vadd.f32 %v2462, %v2432
        %v2464 = vadd.f32 %v2463, %v2433
        %v2465 = vadd.f32 %v2464, %v2434
        %v2466 = vadd.f32 %v2465, %v2435
        %v2467 = vadd.f32 %v2466, %v2436
        %v2468 = vadd.f32 %v2467, %v2437
        %v2469 = vrot.slane %v2468, 4
        %v2470 = vadd.f32 %v2468, %v2469
        %v2471 = vrot.slane %v2470, 2
        %v2472 = vadd.f32 %v2470, %v2471
        %v2473 = vrot.slane %v2472, 1
        %v2474 = vadd.f32 %v2472, %v2473
        %v2475 = vmul.f32 %v2474, 0.00390625
        %v2476 = vpack.c.bf16 %v2475, %v2475
        %v2477 = vld [vmem:[%s3] sm:$0xf]
        %v2478 = vld [vmem:[%s3 + $0x4] sm:$0xf]
        %v2479 = vld [vmem:[%s3 + $0x8] sm:$0xf]
        %v2480 = vld [vmem:[%s3 + $0xc] sm:$0xf]
        %v2481 = vld [vmem:[%s3 + $0x10] sm:$0xf]
        %v2482 = vld [vmem:[%s3 + $0x14] sm:$0xf]
        %v2483 = vld [vmem:[%s3 + $0x18] sm:$0xf]
        %v2484 = vld [vmem:[%s3 + $0x1c] sm:$0xf]
        %v2485 = vld [vmem:[%s3 + $0x20] sm:$0xf]
        %v2486 = vld [vmem:[%s3 + $0x24] sm:$0xf]
        %v2487 = vld [vmem:[%s3 + $0x28] sm:$0xf]
        %v2488 = vld [vmem:[%s3 + $0x2c] sm:$0xf]
        %v2489 = vld [vmem:[%s3 + $0x30] sm:$0xf]
        %v2490 = vld [vmem:[%s3 + $0x34] sm:$0xf]
        %v2491 = vld [vmem:[%s3 + $0x38] sm:$0xf]
        %v2492 = vld [vmem:[%s3 + $0x3c] sm:$0xf]
        %v2493 = vld [vmem:[%s4] sm:$0x1]
        %v2510 = vunpack.c.l.b16 %v2477
        %v2511 = vunpack.c.l.b16 %v2478
        %v2512 = vunpack.c.l.b16 %v2479
        %v2513 = vunpack.c.l.b16 %v2480
        %v2514 = vunpack.c.l.b16 %v2481
        %v2515 = vunpack.c.l.b16 %v2482
        %v2516 = vunpack.c.l.b16 %v2483
        %v2517 = vunpack.c.l.b16 %v2484
        %v2518 = vunpack.c.l.b16 %v2485
        %v2519 = vunpack.c.l.b16 %v2486
        %v2520 = vunpack.c.l.b16 %v2487
        %v2521 = vunpack.c.l.b16 %v2488
        %v2522 = vunpack.c.l.b16 %v2489
        %v2523 = vunpack.c.l.b16 %v2490
        %v2524 = vunpack.c.l.b16 %v2491
        %v2525 = vunpack.c.l.b16 %v2492
        %v2526 = vpack.c.b16 %v2511, %v2510
        %v2527 = vpack.c.b16 %v2513, %v2512
        %v2528 = vpack.c.b16 %v2515, %v2514
        %v2529 = vpack.c.b16 %v2517, %v2516
        %v2530 = vpack.c.b16 %v2519, %v2518
        %v2531 = vpack.c.b16 %v2521, %v2520
        %v2532 = vpack.c.b16 %v2523, %v2522
        %v2533 = vpack.c.b16 %v2525, %v2524
        %2542 = vmatprep.subr.bf16.mxu0 0
        %2543 = vmatpush1.bf16.msra.mxu0 %v2533
        %2544 = vmatprep.subr.bf16.mxu0 0
        %2545 = vmatpush1.bf16.msra.mxu0 %v2532
        %2546 = vmatprep.subr.bf16.mxu0 0
        %2547 = vmatpush1.bf16.msra.mxu0 %v2531
        %2548 = vmatprep.subr.bf16.mxu0 0
        %2549 = vmatpush1.bf16.msra.mxu0 %v2530
        %2550 = vmatprep.subr.bf16.mxu0 0
        %2551 = vmatpush1.bf16.msra.mxu0 %v2529
        %2552 = vmatprep.subr.bf16.mxu0 0
        %2553 = vmatpush1.bf16.msra.mxu0 %v2528
        %2554 = vmatprep.subr.bf16.mxu0 0
        %2555 = vmatpush1.bf16.msra.mxu0 %v2527
        %2556 = vmatprep.subr.bf16.mxu0 0
        %2557 = vmatpush1.bf16.msra.mxu0 %v2526
        %2558 = vmatprep.subr.bf16.mxu0 0
        %2559 = vmatpush2.bf16.msra.mxu0 0
        %2560 = vmatprep.subr.bf16.mxu0 0
        %2561 = vmatpush2.bf16.msra.mxu0 0
        %2562 = vmatprep.subr.bf16.mxu0 0
        %2563 = vmatpush2.bf16.msra.mxu0 0
        %2564 = vmatprep.subr.bf16.mxu0 0
        %2565 = vmatpush2.bf16.msra.mxu0 0
        %2566 = vmatprep.subr.bf16.mxu0 0
        %2567 = vmatpush2.bf16.msra.mxu0 0
        %2568 = vmatprep.subr.bf16.mxu0 0
        %2569 = vmatpush2.bf16.msra.mxu0 0
        %2570 = vmatprep.subr.bf16.mxu0 0
        %2571 = vmatpush2.bf16.msra.mxu0 0
        %2572 = vmatprep.subr.bf16.mxu0 0
        %2573 = vmatpush2.bf16.msra.mxu0 0
        %2574 = vmatprep.mubr.bf16.mxu0 0
        %2575 = vmatmul.mubr.bf16.gmra.mxu0 %v2476
        %v2576 = vpop.f32.mrf.mxu0
        %v2577 = vadd.f32 %v2493, %v2576
        %v2578 = vpop.f32.mrf.mxu0
        %v2579 = vpop.f32.mrf.mxu0
        %v2580 = vpop.f32.mrf.mxu0
        %2581 = vdwg.mxu0
        %v2582 = vmax.f32 %v2577, 0.0
        %v2583 = vpack.c.bf16 %v2582, %v2582
        %v2584 = vld [vmem:[%s5] sm:$0xf]
        %v2585 = vld [vmem:[%s5 + $0x4] sm:$0xf]
        %v2586 = vld [vmem:[%s5 + $0x8] sm:$0xf]
        %v2587 = vld [vmem:[%s5 + $0xc] sm:$0xf]
        %v2588 = vld [vmem:[%s5 + $0x10] sm:$0xf]
        %v2589 = vld [vmem:[%s5 + $0x14] sm:$0xf]
        %v2590 = vld [vmem:[%s5 + $0x18] sm:$0xf]
        %v2591 = vld [vmem:[%s5 + $0x1c] sm:$0xf]
        %v2592 = vld [vmem:[%s5 + $0x20] sm:$0xf]
        %v2593 = vld [vmem:[%s5 + $0x24] sm:$0xf]
        %v2594 = vld [vmem:[%s5 + $0x28] sm:$0xf]
        %v2595 = vld [vmem:[%s5 + $0x2c] sm:$0xf]
        %v2596 = vld [vmem:[%s5 + $0x30] sm:$0xf]
        %v2597 = vld [vmem:[%s5 + $0x34] sm:$0xf]
        %v2598 = vld [vmem:[%s5 + $0x38] sm:$0xf]
        %v2599 = vld [vmem:[%s5 + $0x3c] sm:$0xf]
        %v2600 = vld [vmem:[%s6] sm:$0x1]
        %v2617 = vunpack.c.l.b16 %v2584
        %v2618 = vunpack.c.l.b16 %v2585
        %v2619 = vunpack.c.l.b16 %v2586
        %v2620 = vunpack.c.l.b16 %v2587
        %v2621 = vunpack.c.l.b16 %v2588
        %v2622 = vunpack.c.l.b16 %v2589
        %v2623 = vunpack.c.l.b16 %v2590
        %v2624 = vunpack.c.l.b16 %v2591
        %v2625 = vunpack.c.l.b16 %v2592
        %v2626 = vunpack.c.l.b16 %v2593
        %v2627 = vunpack.c.l.b16 %v2594
        %v2628 = vunpack.c.l.b16 %v2595
        %v2629 = vunpack.c.l.b16 %v2596
        %v2630 = vunpack.c.l.b16 %v2597
        %v2631 = vunpack.c.l.b16 %v2598
        %v2632 = vunpack.c.l.b16 %v2599
        %v2633 = vpack.c.b16 %v2618, %v2617
        %v2634 = vpack.c.b16 %v2620, %v2619
        %v2635 = vpack.c.b16 %v2622, %v2621
        %v2636 = vpack.c.b16 %v2624, %v2623
        %v2637 = vpack.c.b16 %v2626, %v2625
        %v2638 = vpack.c.b16 %v2628, %v2627
        %v2639 = vpack.c.b16 %v2630, %v2629
        %v2640 = vpack.c.b16 %v2632, %v2631
        %2649 = vmatprep.subr.bf16.mxu0 0
        %2650 = vmatpush1.bf16.msra.mxu0 %v2640
        %2651 = vmatprep.subr.bf16.mxu0 0
        %2652 = vmatpush1.bf16.msra.mxu0 %v2639
        %2653 = vmatprep.subr.bf16.mxu0 0
        %2654 = vmatpush1.bf16.msra.mxu0 %v2638
        %2655 = vmatprep.subr.bf16.mxu0 0
        %2656 = vmatpush1.bf16.msra.mxu0 %v2637
        %2657 = vmatprep.subr.bf16.mxu0 0
        %2658 = vmatpush1.bf16.msra.mxu0 %v2636
        %2659 = vmatprep.subr.bf16.mxu0 0
        %2660 = vmatpush1.bf16.msra.mxu0 %v2635
        %2661 = vmatprep.subr.bf16.mxu0 0
        %2662 = vmatpush1.bf16.msra.mxu0 %v2634
        %2663 = vmatprep.subr.bf16.mxu0 0
        %2664 = vmatpush1.bf16.msra.mxu0 %v2633
        %2665 = vmatprep.subr.bf16.mxu0 0
        %2666 = vmatpush2.bf16.msra.mxu0 0
        %2667 = vmatprep.subr.bf16.mxu0 0
        %2668 = vmatpush2.bf16.msra.mxu0 0
        %2669 = vmatprep.subr.bf16.mxu0 0
        %2670 = vmatpush2.bf16.msra.mxu0 0
        %2671 = vmatprep.subr.bf16.mxu0 0
        %2672 = vmatpush2.bf16.msra.mxu0 0
        %2673 = vmatprep.subr.bf16.mxu0 0
        %2674 = vmatpush2.bf16.msra.mxu0 0
        %2675 = vmatprep.subr.bf16.mxu0 0
        %2676 = vmatpush2.bf16.msra.mxu0 0
        %2677 = vmatprep.subr.bf16.mxu0 0
        %2678 = vmatpush2.bf16.msra.mxu0 0
        %2679 = vmatprep.subr.bf16.mxu0 0
        %2680 = vmatpush2.bf16.msra.mxu0 0
        %2681 = vmatprep.mubr.bf16.mxu0 0
        %2682 = vmatmul.mubr.bf16.gmra.mxu0 %v2583
        %v2683 = vpop.f32.mrf.mxu0
        %v2684 = vadd.f32 %v2600, %v2683
        %v2685 = vpop.f32.mrf.mxu0
        %v2686 = vpop.f32.mrf.mxu0
        %v2687 = vpop.f32.mrf.mxu0
        %2688 = vdwg.mxu0
        %2689 = vst [vmem:[%s270] sm:$0x1] %v2684
        %s2690 = sand.u32 %s181, 1
        %s2691 = scalar_lea.sflag [#allocation4], %s2690
        %s2692 = sand.u32 %s181, 1
        %s2693 = scalar_lea.vmem [#allocation3], %s2692
        // Predicated region
        $region49: #{tpu_custom_call.1} parent=47 // pred_check
          %p2694 = pneg %p191
        $region50: #{tpu_custom_call.1} parent=47 // pred_check_branch
          %2696 = sbr.rel (%p2694) target = $region52
        $region51: #{tpu_custom_call.1} parent=47 // pred_region
          %s2698 = ssub.s32 16, 16
          %2699 = vsyncadd %s2691, %s2698
          %s2700 = smul.addr %s21, 16
          %s2701 = scalar_lea.hbm %s7, %s2700
          %s2703 = sshll.u32 %s2693, 4
          %s2704 = int_to_ptr.vmem [resolvable:$true] %s2703
          %2706 = dma.vmem_to_hbm [thread:$0]  %s2704, 16, %s2701, %s2691
        $region52: #{tpu_custom_call.1} parent=47 // pred_fallthru
          _
      $region48: #{tpu_custom_call.1} parent=5 // pred_fallthru
        _
      %p2707 = scmp.le.s32.totalorder 2, %s16
      // Predicated region
      $region53: #{tpu_custom_call.1} parent=5 // pred_check
        %p2708 = pneg %p2707
      $region54: #{tpu_custom_call.1} parent=5 // pred_check_branch
        %2710 = sbr.rel (%p2708) target = $region56
      $region55: #{tpu_custom_call.1} parent=5 // pred_region
        %s2711 = ssub.s32 %s16, 2
        // Predicated region
        $region57: #{tpu_custom_call.1} parent=55 // pred_check
          %p2712 = pneg %p197
        $region58: #{tpu_custom_call.1} parent=55 // pred_check_branch
          %2714 = sbr.rel (%p2712) target = $region60
        $region59: #{tpu_custom_call.1} parent=55 // pred_region
          %s2715 = sand.u32 %s182, 1
          %s2716 = scalar_lea.sflag [#allocation4], %s2715
          %s2717 = sand.u32 %s182, 1
          %s2718 = scalar_lea.vmem [#allocation3], %s2717
          %2719 = dma.done %s2716, 16
        $region60: #{tpu_custom_call.1} parent=55 // pred_fallthru
          _
      $region56: #{tpu_custom_call.1} parent=5 // pred_fallthru
        _
    $region6: #{tpu_custom_call.1} parent=1 // loop_footer
      %s20 = sadd.s32 1, %s16
    $region7: #{tpu_custom_call.1} parent=1 // loop_footer_branch
      %15 = sbr.rel target = $region3
    $region8: #{tpu_custom_call.1} parent=1 // loop_exit
      _
    %2720 = vsyncpa [#allocation4], 1
    %s2721 = scalar_lea.sflag [#allocation4], 1
    %2722 = vsyncpa %s2721, 1

</llo_original>
